<compile_context>
chip_gen: v6e
topology: v6e:2x2x1
jax: 0.10.0
libtpu: 0.0.40
codegen_flags: <defaults>
</compile_context>

<pallas_src>
import functools

import jax
import jax.numpy as jnp
import numpy as np
from jax.experimental import pallas as pl
from jax.experimental.pallas import tpu as pltpu


# ----------------------------------------------------------------------------
# Fused kernel: 2-layer LSTM recurrence + final Linear, one invocation.
# ----------------------------------------------------------------------------
def _lstm_predictor_kernel(x_ref, wih0_ref, whh0_ref, b0_ref,
                           w1_ref, b1_ref,
                           wlin_ref, blin_ref,
                           y_ref,
                           *, n_seq, seq_len, n_hidden):
    T, B, H = n_seq, seq_len, n_hidden   # T = len(sequences) (time), B = seq_len (batch)

    # Layer-0 input projection for ALL time steps in one MXU call, kept as a
    # kernel-local value (T*B x 4H f32 = 32 KiB = 8 vregs here) and sliced
    # with static indices below -- no scratch round-trip (perf item 2).
    xg_all = (jnp.dot(x_ref[...], wih0_ref[...],
                      preferred_element_type=jnp.float32)
              + b0_ref[...])

    whh0 = whh0_ref[...]
    w1 = w1_ref[...]       # stacked [wih1; whh1] -> (2H, 4H)  (perf item 3)
    b1 = b1_ref[...]

    def gates_to_hc(gates, c_prev):
        # PyTorch gate order i, f, g, o.  32-lane slices of a 128-lane vreg
        # are VPU/XLU filler, fine at this size.
        i = jax.nn.sigmoid(gates[:, 0 * H:1 * H])
        f = jax.nn.sigmoid(gates[:, 1 * H:2 * H])
        g = jnp.tanh(gates[:, 2 * H:3 * H])
        o = jax.nn.sigmoid(gates[:, 3 * H:4 * H])
        c_new = f * c_prev + i * g
        h_new = o * jnp.tanh(c_new)
        return h_new, c_new

    h1 = c1 = h2 = c2 = jnp.zeros((B, H), jnp.float32)

    # Fully unrolled straight-line recurrence (T=8): static Python loop gives
    # concrete slice indices; live values (weights + 4 carries + xg_all) fit
    # the 64-vreg budget comfortably at H=32.
    for t in range(T):
        xg_t = xg_all[t * B:(t + 1) * B, :]                 # static (B, 4H) slice

        # Layer 0: only the recurrent projection (input part precomputed).
        g0 = xg_t + jnp.dot(h1, whh0, preferred_element_type=jnp.float32)
        h1, c1 = gates_to_hc(g0, c1)

        # TODO(synk): nn.LSTM inter-layer dropout(p=0.5) is train-mode only;
        # this is the deterministic eval-mode forward (identity).
        # Layer 1: single fused matmul [h1, h2] @ [wih1; whh1] + b1.
        h12 = jnp.concatenate([h1, h2], axis=1)             # (B, 2H)
        g1 = jnp.dot(h12, w1, preferred_element_type=jnp.float32) + b1
        h2, c2 = gates_to_hc(g1, c2)

    # Fused, lane-padded Linear(n_hidden -> 2) on the final layer-2 hidden
    # state (== lstm_out.view(seq_len, N, H)[-1] when N == seq_len).
    y_ref[...] = (jnp.dot(h2, wlin_ref[...], preferred_element_type=jnp.float32)
                  + blin_ref[...])


def lstm_predictor_forward(x, params, seq_len, n_hidden):
    N, S, F = x.shape
    assert S == seq_len
    if N != seq_len:
        # TODO(synk): for N != seq_len the PyTorch raw-memory view
        # lstm_out.view(seq_len, N, H)[-1] selects a mixed (t, b) slice; that
        # general path is not implemented in the fused kernel.
        raise NotImplementedError("fused kernel assumes len(sequences) == seq_len")

    H = n_hidden
    LANES = 128

    # Scaling guard (perf item 5 / v7x 64 MiB VMEM): the layer-0 projection is
    # staged as an in-kernel value of N*seq_len*4H f32.
    if N * seq_len * 4 * H * 4 > (2 << 20):
        # TODO(synk): tile the time axis of the layer-0 projection
        # (pltpu.emit_pipeline over T-chunks) before scaling N*seq_len*H.
        raise NotImplementedError("layer-0 projection staging too large for the fused kernel")

    x_flat = x.reshape(N * seq_len, F)                       # layout-preserving

    # Param prep (outside the kernel, tiny):
    #  - stack layer-1 input/recurrent weights -> one (2H, 4H) matmul per step
    #  - lane-pad the Linear head so the kernel's only HBM store is lane-dense
    w1 = jnp.concatenate([params["wih1"], params["whh1"]], axis=0)   # (2H, 4H)
    wlin_p = jnp.pad(params["wlin"], ((0, 0), (0, LANES - params["wlin"].shape[1])))
    blin_p = jnp.pad(params["blin"], ((0, 0), (0, LANES - params["blin"].shape[1])))

    kernel = functools.partial(_lstm_predictor_kernel,
                               n_seq=N, seq_len=seq_len, n_hidden=H)
    y_pad = pl.pallas_call(
        kernel,
        out_shape=jax.ShapeDtypeStruct((N, LANES), jnp.float32),
        in_specs=[pl.BlockSpec(memory_space=pltpu.MemorySpace.VMEM)
                  for _ in range(8)],
        out_specs=pl.BlockSpec(memory_space=pltpu.MemorySpace.VMEM),
    )(x_flat, params["wih0"], params["whh0"], params["b0"],
      w1, params["b1"], wlin_p, blin_p)
    return y_pad[:, :2]


# ----------------------------------------------------------------------------
# Parameters (PyTorch weight_ih/hh stored transposed as (in, 4H); gate order
# i, f, g, o; b = b_ih + b_hh precombined).
# ----------------------------------------------------------------------------
def init_params(key, n_features, n_hidden):
    H = n_hidden
    bound = 1.0 / (H ** 0.5)
    keys = jax.random.split(key, 12)

    def u(k_, shape):
        return jax.random.uniform(k_, shape, jnp.float32, -bound, bound)

    return dict(
        wih0=u(keys[0], (n_features, 4 * H)),
        whh0=u(keys[1], (H, 4 * H)),
        b0=u(keys[2], (1, 4 * H)) + u(keys[3], (1, 4 * H)),
        wih1=u(keys[4], (H, 4 * H)),
        whh1=u(keys[5], (H, 4 * H)),
        b1=u(keys[6], (1, 4 * H)) + u(keys[7], (1, 4 * H)),
        wlin=u(keys[8], (H, 2)),
        blin=u(keys[9], (1, 2)),
    )


# ----------------------------------------------------------------------------
# Pure-JAX reference (mirrors the PyTorch eval-mode forward) for validation.
# Kept at HIGHEST precision as the "f32 ground truth"; the kernel uses
# single-pass bf16-operand MXU matmuls (default precision) per the perf
# review, so the comparison tolerance below accounts for that.
# ----------------------------------------------------------------------------
def _reference_forward(x, params, seq_len, n_hidden):
    T, B, F = x.shape
    H = n_hidden
    prec = jax.lax.Precision.HIGHEST

    def cell(xt, h, c, wih, whh, b):
        g = jnp.dot(xt, wih, precision=prec) + jnp.dot(h, whh, precision=prec) + b
        i = jax.nn.sigmoid(g[:, 0 * H:1 * H])
        f = jax.nn.sigmoid(g[:, 1 * H:2 * H])
        gg = jnp.tanh(g[:, 2 * H:3 * H])
        o = jax.nn.sigmoid(g[:, 3 * H:4 * H])
        c = f * c + i * gg
        h = o * jnp.tanh(c)
        return h, c

    h1 = c1 = h2 = c2 = jnp.zeros((B, H), jnp.float32)
    outs = []
    for t in range(T):
        h1, c1 = cell(x[t], h1, c1, params["wih0"], params["whh0"], params["b0"])
        h2, c2 = cell(h1, h2, c2, params["wih1"], params["whh1"], params["b1"])
        outs.append(h2)
    lstm_out = jnp.stack(outs)                       # (N, seq_len, H), PyTorch layout
    last = lstm_out.reshape(seq_len, T, H)[-1]       # raw-memory view(seq_len, N, H)[-1]
    return jnp.dot(last, params["wlin"], precision=prec) + params["blin"]


if __name__ == "__main__":
    N = 8            # len(sequences)
    seq_len = 8
    n_features = 4
    n_hidden = 32

    key = jax.random.PRNGKey(0)
    kx, kp = jax.random.split(key)
    x = jax.random.normal(kx, (N, seq_len, n_features), dtype=jnp.float32)
    params = init_params(kp, n_features, n_hidden)

    y = lstm_predictor_forward(x, params, seq_len=seq_len, n_hidden=n_hidden)
    y = jax.block_until_ready(y)
    assert y.shape == (N, 2) and y.dtype == jnp.float32

    y_ref = jax.block_until_ready(_reference_forward(x, params, seq_len, n_hidden))
    # Tolerance reflects single-pass bf16-operand MXU matmuls in the kernel
    # vs. the HIGHEST-precision f32 reference (accepted perf/accuracy trade-off).
    assert np.allclose(np.asarray(y), np.asarray(y_ref), atol=2e-2, rtol=2e-2), (
        np.max(np.abs(np.asarray(y) - np.asarray(y_ref))))
    print("KERNEL_OK")
</pallas_src>

<mosaic_0001>
module attributes {stable_mosaic.version = 11 : i64} {
  func.func @_lstm_predictor_kernel(%arg0: memref<64x4xf32, #tpu.memory_space<vmem>>, %arg1: memref<4x128xf32, #tpu.memory_space<vmem>>, %arg2: memref<32x128xf32, #tpu.memory_space<vmem>>, %arg3: memref<1x128xf32, #tpu.memory_space<vmem>>, %arg4: memref<64x128xf32, #tpu.memory_space<vmem>>, %arg5: memref<1x128xf32, #tpu.memory_space<vmem>>, %arg6: memref<32x128xf32, #tpu.memory_space<vmem>>, %arg7: memref<1x128xf32, #tpu.memory_space<vmem>>, %arg8: memref<8x128xf32, #tpu.memory_space<vmem>>) attributes {dimension_semantics = [], scalar_prefetch = 0 : i64, scratch_operands = 0 : i64, tpu.core_type = #tpu.core_type<tc>} {
    %c0 = arith.constant 0 : index
    %c0_0 = arith.constant 0 : index
    %0 = vector.load %arg0[%c0, %c0_0] : memref<64x4xf32, #tpu.memory_space<vmem>>, vector<64x4xf32>
    %c0_1 = arith.constant 0 : index
    %c0_2 = arith.constant 0 : index
    %1 = vector.load %arg1[%c0_1, %c0_2] : memref<4x128xf32, #tpu.memory_space<vmem>>, vector<4x128xf32>
    %cst = arith.constant dense<0.000000e+00> : vector<64x128xf32>
    %2 = tpu.matmul %0, %1, %cst {dimension_numbers = #tpu.dot_dimension_numbers<[1], [0], [0], [1], [0, 0, 1, 1], [], []>} : vector<64x4xf32>, vector<4x128xf32>, vector<64x128xf32> -> vector<64x128xf32>
    %c0_3 = arith.constant 0 : index
    %c0_4 = arith.constant 0 : index
    %3 = vector.load %arg3[%c0_3, %c0_4] : memref<1x128xf32, #tpu.memory_space<vmem>>, vector<1x128xf32>
    %4 = vector.broadcast %3 : vector<1x128xf32> to vector<64x128xf32>
    %5 = arith.addf %2, %4 : vector<64x128xf32>
    %c0_5 = arith.constant 0 : index
    %c0_6 = arith.constant 0 : index
    %6 = vector.load %arg2[%c0_5, %c0_6] : memref<32x128xf32, #tpu.memory_space<vmem>>, vector<32x128xf32>
    %c0_7 = arith.constant 0 : index
    %c0_8 = arith.constant 0 : index
    %7 = vector.load %arg4[%c0_7, %c0_8] : memref<64x128xf32, #tpu.memory_space<vmem>>, vector<64x128xf32>
    %c0_9 = arith.constant 0 : index
    %c0_10 = arith.constant 0 : index
    %8 = vector.load %arg5[%c0_9, %c0_10] : memref<1x128xf32, #tpu.memory_space<vmem>>, vector<1x128xf32>
    %cst_11 = arith.constant 0.000000e+00 : f32
    %9 = vector.broadcast %cst_11 : f32 to vector<8x32xf32>
    %10 = vector.extract_strided_slice %5 {offsets = [0, 0], sizes = [8, 128], strides = [1, 1]} : vector<64x128xf32> to vector<8x128xf32>
    %cst_12 = arith.constant dense<0.000000e+00> : vector<8x128xf32>
    %11 = tpu.matmul %9, %6, %cst_12 {dimension_numbers = #tpu.dot_dimension_numbers<[1], [0], [0], [1], [0, 0, 1, 1], [], []>} : vector<8x32xf32>, vector<32x128xf32>, vector<8x128xf32> -> vector<8x128xf32>
    %12 = arith.addf %10, %11 : vector<8x128xf32>
    %13 = vector.extract_strided_slice %12 {offsets = [0, 0], sizes = [8, 32], strides = [1, 1]} : vector<8x128xf32> to vector<8x32xf32>
    %14 = arith.negf %13 : vector<8x32xf32>
    %15 = math.exp %14 : vector<8x32xf32>
    %cst_13 = arith.constant 1.000000e+00 : f32
    %16 = vector.broadcast %cst_13 : f32 to vector<8x32xf32>
    %17 = arith.addf %16, %15 : vector<8x32xf32>
    %18 = arith.divf %16, %17 : vector<8x32xf32>
    %19 = vector.extract_strided_slice %12 {offsets = [0, 32], sizes = [8, 32], strides = [1, 1]} : vector<8x128xf32> to vector<8x32xf32>
    %20 = arith.negf %19 : vector<8x32xf32>
    %21 = math.exp %20 : vector<8x32xf32>
    %cst_14 = arith.constant 1.000000e+00 : f32
    %22 = vector.broadcast %cst_14 : f32 to vector<8x32xf32>
    %23 = arith.addf %22, %21 : vector<8x32xf32>
    %24 = arith.divf %22, %23 : vector<8x32xf32>
    %25 = vector.extract_strided_slice %12 {offsets = [0, 64], sizes = [8, 32], strides = [1, 1]} : vector<8x128xf32> to vector<8x32xf32>
    %26 = math.tanh %25 : vector<8x32xf32>
    %27 = vector.extract_strided_slice %12 {offsets = [0, 96], sizes = [8, 32], strides = [1, 1]} : vector<8x128xf32> to vector<8x32xf32>
    %28 = arith.negf %27 : vector<8x32xf32>
    %29 = math.exp %28 : vector<8x32xf32>
    %cst_15 = arith.constant 1.000000e+00 : f32
    %30 = vector.broadcast %cst_15 : f32 to vector<8x32xf32>
    %31 = arith.addf %30, %29 : vector<8x32xf32>
    %32 = arith.divf %30, %31 : vector<8x32xf32>
    %33 = arith.mulf %24, %9 : vector<8x32xf32>
    %34 = arith.mulf %18, %26 : vector<8x32xf32>
    %35 = arith.addf %33, %34 : vector<8x32xf32>
    %36 = math.tanh %35 : vector<8x32xf32>
    %37 = arith.mulf %32, %36 : vector<8x32xf32>
    %38 = tpu.concatenate %37, %9 in 1 : vector<8x32xf32>, vector<8x32xf32> -> vector<8x64xf32>
    %cst_16 = arith.constant dense<0.000000e+00> : vector<8x128xf32>
    %39 = tpu.matmul %38, %7, %cst_16 {dimension_numbers = #tpu.dot_dimension_numbers<[1], [0], [0], [1], [0, 0, 1, 1], [], []>} : vector<8x64xf32>, vector<64x128xf32>, vector<8x128xf32> -> vector<8x128xf32>
    %40 = vector.broadcast %8 : vector<1x128xf32> to vector<8x128xf32>
    %41 = arith.addf %39, %40 : vector<8x128xf32>
    %42 = vector.extract_strided_slice %41 {offsets = [0, 0], sizes = [8, 32], strides = [1, 1]} : vector<8x128xf32> to vector<8x32xf32>
    %43 = arith.negf %42 : vector<8x32xf32>
    %44 = math.exp %43 : vector<8x32xf32>
    %cst_17 = arith.constant 1.000000e+00 : f32
    %45 = vector.broadcast %cst_17 : f32 to vector<8x32xf32>
    %46 = arith.addf %45, %44 : vector<8x32xf32>
    %47 = arith.divf %45, %46 : vector<8x32xf32>
    %48 = vector.extract_strided_slice %41 {offsets = [0, 32], sizes = [8, 32], strides = [1, 1]} : vector<8x128xf32> to vector<8x32xf32>
    %49 = arith.negf %48 : vector<8x32xf32>
    %50 = math.exp %49 : vector<8x32xf32>
    %cst_18 = arith.constant 1.000000e+00 : f32
    %51 = vector.broadcast %cst_18 : f32 to vector<8x32xf32>
    %52 = arith.addf %51, %50 : vector<8x32xf32>
    %53 = arith.divf %51, %52 : vector<8x32xf32>
    %54 = vector.extract_strided_slice %41 {offsets = [0, 64], sizes = [8, 32], strides = [1, 1]} : vector<8x128xf32> to vector<8x32xf32>
    %55 = math.tanh %54 : vector<8x32xf32>
    %56 = vector.extract_strided_slice %41 {offsets = [0, 96], sizes = [8, 32], strides = [1, 1]} : vector<8x128xf32> to vector<8x32xf32>
    %57 = arith.negf %56 : vector<8x32xf32>
    %58 = math.exp %57 : vector<8x32xf32>
    %cst_19 = arith.constant 1.000000e+00 : f32
    %59 = vector.broadcast %cst_19 : f32 to vector<8x32xf32>
    %60 = arith.addf %59, %58 : vector<8x32xf32>
    %61 = arith.divf %59, %60 : vector<8x32xf32>
    %62 = arith.mulf %53, %9 : vector<8x32xf32>
    %63 = arith.mulf %47, %55 : vector<8x32xf32>
    %64 = arith.addf %62, %63 : vector<8x32xf32>
    %65 = math.tanh %64 : vector<8x32xf32>
    %66 = arith.mulf %61, %65 : vector<8x32xf32>
    %67 = vector.extract_strided_slice %5 {offsets = [8, 0], sizes = [8, 128], strides = [1, 1]} : vector<64x128xf32> to vector<8x128xf32>
    %cst_20 = arith.constant dense<0.000000e+00> : vector<8x128xf32>
    %68 = tpu.matmul %37, %6, %cst_20 {dimension_numbers = #tpu.dot_dimension_numbers<[1], [0], [0], [1], [0, 0, 1, 1], [], []>} : vector<8x32xf32>, vector<32x128xf32>, vector<8x128xf32> -> vector<8x128xf32>
    %69 = arith.addf %67, %68 : vector<8x128xf32>
    %70 = vector.extract_strided_slice %69 {offsets = [0, 0], sizes = [8, 32], strides = [1, 1]} : vector<8x128xf32> to vector<8x32xf32>
    %71 = arith.negf %70 : vector<8x32xf32>
    %72 = math.exp %71 : vector<8x32xf32>
    %cst_21 = arith.constant 1.000000e+00 : f32
    %73 = vector.broadcast %cst_21 : f32 to vector<8x32xf32>
    %74 = arith.addf %73, %72 : vector<8x32xf32>
    %75 = arith.divf %73, %74 : vector<8x32xf32>
    %76 = vector.extract_strided_slice %69 {offsets = [0, 32], sizes = [8, 32], strides = [1, 1]} : vector<8x128xf32> to vector<8x32xf32>
    %77 = arith.negf %76 : vector<8x32xf32>
    %78 = math.exp %77 : vector<8x32xf32>
    %cst_22 = arith.constant 1.000000e+00 : f32
    %79 = vector.broadcast %cst_22 : f32 to vector<8x32xf32>
    %80 = arith.addf %79, %78 : vector<8x32xf32>
    %81 = arith.divf %79, %80 : vector<8x32xf32>
    %82 = vector.extract_strided_slice %69 {offsets = [0, 64], sizes = [8, 32], strides = [1, 1]} : vector<8x128xf32> to vector<8x32xf32>
    %83 = math.tanh %82 : vector<8x32xf32>
    %84 = vector.extract_strided_slice %69 {offsets = [0, 96], sizes = [8, 32], strides = [1, 1]} : vector<8x128xf32> to vector<8x32xf32>
    %85 = arith.negf %84 : vector<8x32xf32>
    %86 = math.exp %85 : vector<8x32xf32>
    %cst_23 = arith.constant 1.000000e+00 : f32
    %87 = vector.broadcast %cst_23 : f32 to vector<8x32xf32>
    %88 = arith.addf %87, %86 : vector<8x32xf32>
    %89 = arith.divf %87, %88 : vector<8x32xf32>
    %90 = arith.mulf %81, %35 : vector<8x32xf32>
    %91 = arith.mulf %75, %83 : vector<8x32xf32>
    %92 = arith.addf %90, %91 : vector<8x32xf32>
    %93 = math.tanh %92 : vector<8x32xf32>
    %94 = arith.mulf %89, %93 : vector<8x32xf32>
    %95 = tpu.concatenate %94, %66 in 1 : vector<8x32xf32>, vector<8x32xf32> -> vector<8x64xf32>
    %cst_24 = arith.constant dense<0.000000e+00> : vector<8x128xf32>
    %96 = tpu.matmul %95, %7, %cst_24 {dimension_numbers = #tpu.dot_dimension_numbers<[1], [0], [0], [1], [0, 0, 1, 1], [], []>} : vector<8x64xf32>, vector<64x128xf32>, vector<8x128xf32> -> vector<8x128xf32>
    %97 = vector.broadcast %8 : vector<1x128xf32> to vector<8x128xf32>
    %98 = arith.addf %96, %97 : vector<8x128xf32>
    %99 = vector.extract_strided_slice %98 {offsets = [0, 0], sizes = [8, 32], strides = [1, 1]} : vector<8x128xf32> to vector<8x32xf32>
    %100 = arith.negf %99 : vector<8x32xf32>
    %101 = math.exp %100 : vector<8x32xf32>
    %cst_25 = arith.constant 1.000000e+00 : f32
    %102 = vector.broadcast %cst_25 : f32 to vector<8x32xf32>
    %103 = arith.addf %102, %101 : vector<8x32xf32>
    %104 = arith.divf %102, %103 : vector<8x32xf32>
    %105 = vector.extract_strided_slice %98 {offsets = [0, 32], sizes = [8, 32], strides = [1, 1]} : vector<8x128xf32> to vector<8x32xf32>
    %106 = arith.negf %105 : vector<8x32xf32>
    %107 = math.exp %106 : vector<8x32xf32>
    %cst_26 = arith.constant 1.000000e+00 : f32
    %108 = vector.broadcast %cst_26 : f32 to vector<8x32xf32>
    %109 = arith.addf %108, %107 : vector<8x32xf32>
    %110 = arith.divf %108, %109 : vector<8x32xf32>
    %111 = vector.extract_strided_slice %98 {offsets = [0, 64], sizes = [8, 32], strides = [1, 1]} : vector<8x128xf32> to vector<8x32xf32>
    %112 = math.tanh %111 : vector<8x32xf32>
    %113 = vector.extract_strided_slice %98 {offsets = [0, 96], sizes = [8, 32], strides = [1, 1]} : vector<8x128xf32> to vector<8x32xf32>
    %114 = arith.negf %113 : vector<8x32xf32>
    %115 = math.exp %114 : vector<8x32xf32>
    %cst_27 = arith.constant 1.000000e+00 : f32
    %116 = vector.broadcast %cst_27 : f32 to vector<8x32xf32>
    %117 = arith.addf %116, %115 : vector<8x32xf32>
    %118 = arith.divf %116, %117 : vector<8x32xf32>
    %119 = arith.mulf %110, %64 : vector<8x32xf32>
    %120 = arith.mulf %104, %112 : vector<8x32xf32>
    %121 = arith.addf %119, %120 : vector<8x32xf32>
    %122 = math.tanh %121 : vector<8x32xf32>
    %123 = arith.mulf %118, %122 : vector<8x32xf32>
    %124 = vector.extract_strided_slice %5 {offsets = [16, 0], sizes = [8, 128], strides = [1, 1]} : vector<64x128xf32> to vector<8x128xf32>
    %cst_28 = arith.constant dense<0.000000e+00> : vector<8x128xf32>
    %125 = tpu.matmul %94, %6, %cst_28 {dimension_numbers = #tpu.dot_dimension_numbers<[1], [0], [0], [1], [0, 0, 1, 1], [], []>} : vector<8x32xf32>, vector<32x128xf32>, vector<8x128xf32> -> vector<8x128xf32>
    %126 = arith.addf %124, %125 : vector<8x128xf32>
    %127 = vector.extract_strided_slice %126 {offsets = [0, 0], sizes = [8, 32], strides = [1, 1]} : vector<8x128xf32> to vector<8x32xf32>
    %128 = arith.negf %127 : vector<8x32xf32>
    %129 = math.exp %128 : vector<8x32xf32>
    %cst_29 = arith.constant 1.000000e+00 : f32
    %130 = vector.broadcast %cst_29 : f32 to vector<8x32xf32>
    %131 = arith.addf %130, %129 : vector<8x32xf32>
    %132 = arith.divf %130, %131 : vector<8x32xf32>
    %133 = vector.extract_strided_slice %126 {offsets = [0, 32], sizes = [8, 32], strides = [1, 1]} : vector<8x128xf32> to vector<8x32xf32>
    %134 = arith.negf %133 : vector<8x32xf32>
    %135 = math.exp %134 : vector<8x32xf32>
    %cst_30 = arith.constant 1.000000e+00 : f32
    %136 = vector.broadcast %cst_30 : f32 to vector<8x32xf32>
    %137 = arith.addf %136, %135 : vector<8x32xf32>
    %138 = arith.divf %136, %137 : vector<8x32xf32>
    %139 = vector.extract_strided_slice %126 {offsets = [0, 64], sizes = [8, 32], strides = [1, 1]} : vector<8x128xf32> to vector<8x32xf32>
    %140 = math.tanh %139 : vector<8x32xf32>
    %141 = vector.extract_strided_slice %126 {offsets = [0, 96], sizes = [8, 32], strides = [1, 1]} : vector<8x128xf32> to vector<8x32xf32>
    %142 = arith.negf %141 : vector<8x32xf32>
    %143 = math.exp %142 : vector<8x32xf32>
    %cst_31 = arith.constant 1.000000e+00 : f32
    %144 = vector.broadcast %cst_31 : f32 to vector<8x32xf32>
    %145 = arith.addf %144, %143 : vector<8x32xf32>
    %146 = arith.divf %144, %145 : vector<8x32xf32>
    %147 = arith.mulf %138, %92 : vector<8x32xf32>
    %148 = arith.mulf %132, %140 : vector<8x32xf32>
    %149 = arith.addf %147, %148 : vector<8x32xf32>
    %150 = math.tanh %149 : vector<8x32xf32>
    %151 = arith.mulf %146, %150 : vector<8x32xf32>
    %152 = tpu.concatenate %151, %123 in 1 : vector<8x32xf32>, vector<8x32xf32> -> vector<8x64xf32>
    %cst_32 = arith.constant dense<0.000000e+00> : vector<8x128xf32>
    %153 = tpu.matmul %152, %7, %cst_32 {dimension_numbers = #tpu.dot_dimension_numbers<[1], [0], [0], [1], [0, 0, 1, 1], [], []>} : vector<8x64xf32>, vector<64x128xf32>, vector<8x128xf32> -> vector<8x128xf32>
    %154 = vector.broadcast %8 : vector<1x128xf32> to vector<8x128xf32>
    %155 = arith.addf %153, %154 : vector<8x128xf32>
    %156 = vector.extract_strided_slice %155 {offsets = [0, 0], sizes = [8, 32], strides = [1, 1]} : vector<8x128xf32> to vector<8x32xf32>
    %157 = arith.negf %156 : vector<8x32xf32>
    %158 = math.exp %157 : vector<8x32xf32>
    %cst_33 = arith.constant 1.000000e+00 : f32
    %159 = vector.broadcast %cst_33 : f32 to vector<8x32xf32>
    %160 = arith.addf %159, %158 : vector<8x32xf32>
    %161 = arith.divf %159, %160 : vector<8x32xf32>
    %162 = vector.extract_strided_slice %155 {offsets = [0, 32], sizes = [8, 32], strides = [1, 1]} : vector<8x128xf32> to vector<8x32xf32>
    %163 = arith.negf %162 : vector<8x32xf32>
    %164 = math.exp %163 : vector<8x32xf32>
    %cst_34 = arith.constant 1.000000e+00 : f32
    %165 = vector.broadcast %cst_34 : f32 to vector<8x32xf32>
    %166 = arith.addf %165, %164 : vector<8x32xf32>
    %167 = arith.divf %165, %166 : vector<8x32xf32>
    %168 = vector.extract_strided_slice %155 {offsets = [0, 64], sizes = [8, 32], strides = [1, 1]} : vector<8x128xf32> to vector<8x32xf32>
    %169 = math.tanh %168 : vector<8x32xf32>
    %170 = vector.extract_strided_slice %155 {offsets = [0, 96], sizes = [8, 32], strides = [1, 1]} : vector<8x128xf32> to vector<8x32xf32>
    %171 = arith.negf %170 : vector<8x32xf32>
    %172 = math.exp %171 : vector<8x32xf32>
    %cst_35 = arith.constant 1.000000e+00 : f32
    %173 = vector.broadcast %cst_35 : f32 to vector<8x32xf32>
    %174 = arith.addf %173, %172 : vector<8x32xf32>
    %175 = arith.divf %173, %174 : vector<8x32xf32>
    %176 = arith.mulf %167, %121 : vector<8x32xf32>
    %177 = arith.mulf %161, %169 : vector<8x32xf32>
    %178 = arith.addf %176, %177 : vector<8x32xf32>
    %179 = math.tanh %178 : vector<8x32xf32>
    %180 = arith.mulf %175, %179 : vector<8x32xf32>
    %181 = vector.extract_strided_slice %5 {offsets = [24, 0], sizes = [8, 128], strides = [1, 1]} : vector<64x128xf32> to vector<8x128xf32>
    %cst_36 = arith.constant dense<0.000000e+00> : vector<8x128xf32>
    %182 = tpu.matmul %151, %6, %cst_36 {dimension_numbers = #tpu.dot_dimension_numbers<[1], [0], [0], [1], [0, 0, 1, 1], [], []>} : vector<8x32xf32>, vector<32x128xf32>, vector<8x128xf32> -> vector<8x128xf32>
    %183 = arith.addf %181, %182 : vector<8x128xf32>
    %184 = vector.extract_strided_slice %183 {offsets = [0, 0], sizes = [8, 32], strides = [1, 1]} : vector<8x128xf32> to vector<8x32xf32>
    %185 = arith.negf %184 : vector<8x32xf32>
    %186 = math.exp %185 : vector<8x32xf32>
    %cst_37 = arith.constant 1.000000e+00 : f32
    %187 = vector.broadcast %cst_37 : f32 to vector<8x32xf32>
    %188 = arith.addf %187, %186 : vector<8x32xf32>
    %189 = arith.divf %187, %188 : vector<8x32xf32>
    %190 = vector.extract_strided_slice %183 {offsets = [0, 32], sizes = [8, 32], strides = [1, 1]} : vector<8x128xf32> to vector<8x32xf32>
    %191 = arith.negf %190 : vector<8x32xf32>
    %192 = math.exp %191 : vector<8x32xf32>
    %cst_38 = arith.constant 1.000000e+00 : f32
    %193 = vector.broadcast %cst_38 : f32 to vector<8x32xf32>
    %194 = arith.addf %193, %192 : vector<8x32xf32>
    %195 = arith.divf %193, %194 : vector<8x32xf32>
    %196 = vector.extract_strided_slice %183 {offsets = [0, 64], sizes = [8, 32], strides = [1, 1]} : vector<8x128xf32> to vector<8x32xf32>
    %197 = math.tanh %196 : vector<8x32xf32>
    %198 = vector.extract_strided_slice %183 {offsets = [0, 96], sizes = [8, 32], strides = [1, 1]} : vector<8x128xf32> to vector<8x32xf32>
    %199 = arith.negf %198 : vector<8x32xf32>
    %200 = math.exp %199 : vector<8x32xf32>
    %cst_39 = arith.constant 1.000000e+00 : f32
    %201 = vector.broadcast %cst_39 : f32 to vector<8x32xf32>
    %202 = arith.addf %201, %200 : vector<8x32xf32>
    %203 = arith.divf %201, %202 : vector<8x32xf32>
    %204 = arith.mulf %195, %149 : vector<8x32xf32>
    %205 = arith.mulf %189, %197 : vector<8x32xf32>
    %206 = arith.addf %204, %205 : vector<8x32xf32>
    %207 = math.tanh %206 : vector<8x32xf32>
    %208 = arith.mulf %203, %207 : vector<8x32xf32>
    %209 = tpu.concatenate %208, %180 in 1 : vector<8x32xf32>, vector<8x32xf32> -> vector<8x64xf32>
    %cst_40 = arith.constant dense<0.000000e+00> : vector<8x128xf32>
    %210 = tpu.matmul %209, %7, %cst_40 {dimension_numbers = #tpu.dot_dimension_numbers<[1], [0], [0], [1], [0, 0, 1, 1], [], []>} : vector<8x64xf32>, vector<64x128xf32>, vector<8x128xf32> -> vector<8x128xf32>
    %211 = vector.broadcast %8 : vector<1x128xf32> to vector<8x128xf32>
    %212 = arith.addf %210, %211 : vector<8x128xf32>
    %213 = vector.extract_strided_slice %212 {offsets = [0, 0], sizes = [8, 32], strides = [1, 1]} : vector<8x128xf32> to vector<8x32xf32>
    %214 = arith.negf %213 : vector<8x32xf32>
    %215 = math.exp %214 : vector<8x32xf32>
    %cst_41 = arith.constant 1.000000e+00 : f32
    %216 = vector.broadcast %cst_41 : f32 to vector<8x32xf32>
    %217 = arith.addf %216, %215 : vector<8x32xf32>
    %218 = arith.divf %216, %217 : vector<8x32xf32>
    %219 = vector.extract_strided_slice %212 {offsets = [0, 32], sizes = [8, 32], strides = [1, 1]} : vector<8x128xf32> to vector<8x32xf32>
    %220 = arith.negf %219 : vector<8x32xf32>
    %221 = math.exp %220 : vector<8x32xf32>
    %cst_42 = arith.constant 1.000000e+00 : f32
    %222 = vector.broadcast %cst_42 : f32 to vector<8x32xf32>
    %223 = arith.addf %222, %221 : vector<8x32xf32>
    %224 = arith.divf %222, %223 : vector<8x32xf32>
    %225 = vector.extract_strided_slice %212 {offsets = [0, 64], sizes = [8, 32], strides = [1, 1]} : vector<8x128xf32> to vector<8x32xf32>
    %226 = math.tanh %225 : vector<8x32xf32>
    %227 = vector.extract_strided_slice %212 {offsets = [0, 96], sizes = [8, 32], strides = [1, 1]} : vector<8x128xf32> to vector<8x32xf32>
    %228 = arith.negf %227 : vector<8x32xf32>
    %229 = math.exp %228 : vector<8x32xf32>
    %cst_43 = arith.constant 1.000000e+00 : f32
    %230 = vector.broadcast %cst_43 : f32 to vector<8x32xf32>
    %231 = arith.addf %230, %229 : vector<8x32xf32>
    %232 = arith.divf %230, %231 : vector<8x32xf32>
    %233 = arith.mulf %224, %178 : vector<8x32xf32>
    %234 = arith.mulf %218, %226 : vector<8x32xf32>
    %235 = arith.addf %233, %234 : vector<8x32xf32>
    %236 = math.tanh %235 : vector<8x32xf32>
    %237 = arith.mulf %232, %236 : vector<8x32xf32>
    %238 = vector.extract_strided_slice %5 {offsets = [32, 0], sizes = [8, 128], strides = [1, 1]} : vector<64x128xf32> to vector<8x128xf32>
    %cst_44 = arith.constant dense<0.000000e+00> : vector<8x128xf32>
    %239 = tpu.matmul %208, %6, %cst_44 {dimension_numbers = #tpu.dot_dimension_numbers<[1], [0], [0], [1], [0, 0, 1, 1], [], []>} : vector<8x32xf32>, vector<32x128xf32>, vector<8x128xf32> -> vector<8x128xf32>
    %240 = arith.addf %238, %239 : vector<8x128xf32>
    %241 = vector.extract_strided_slice %240 {offsets = [0, 0], sizes = [8, 32], strides = [1, 1]} : vector<8x128xf32> to vector<8x32xf32>
    %242 = arith.negf %241 : vector<8x32xf32>
    %243 = math.exp %242 : vector<8x32xf32>
    %cst_45 = arith.constant 1.000000e+00 : f32
    %244 = vector.broadcast %cst_45 : f32 to vector<8x32xf32>
    %245 = arith.addf %244, %243 : vector<8x32xf32>
    %246 = arith.divf %244, %245 : vector<8x32xf32>
    %247 = vector.extract_strided_slice %240 {offsets = [0, 32], sizes = [8, 32], strides = [1, 1]} : vector<8x128xf32> to vector<8x32xf32>
    %248 = arith.negf %247 : vector<8x32xf32>
    %249 = math.exp %248 : vector<8x32xf32>
    %cst_46 = arith.constant 1.000000e+00 : f32
    %250 = vector.broadcast %cst_46 : f32 to vector<8x32xf32>
    %251 = arith.addf %250, %249 : vector<8x32xf32>
    %252 = arith.divf %250, %251 : vector<8x32xf32>
    %253 = vector.extract_strided_slice %240 {offsets = [0, 64], sizes = [8, 32], strides = [1, 1]} : vector<8x128xf32> to vector<8x32xf32>
    %254 = math.tanh %253 : vector<8x32xf32>
    %255 = vector.extract_strided_slice %240 {offsets = [0, 96], sizes = [8, 32], strides = [1, 1]} : vector<8x128xf32> to vector<8x32xf32>
    %256 = arith.negf %255 : vector<8x32xf32>
    %257 = math.exp %256 : vector<8x32xf32>
    %cst_47 = arith.constant 1.000000e+00 : f32
    %258 = vector.broadcast %cst_47 : f32 to vector<8x32xf32>
    %259 = arith.addf %258, %257 : vector<8x32xf32>
    %260 = arith.divf %258, %259 : vector<8x32xf32>
    %261 = arith.mulf %252, %206 : vector<8x32xf32>
    %262 = arith.mulf %246, %254 : vector<8x32xf32>
    %263 = arith.addf %261, %262 : vector<8x32xf32>
    %264 = math.tanh %263 : vector<8x32xf32>
    %265 = arith.mulf %260, %264 : vector<8x32xf32>
    %266 = tpu.concatenate %265, %237 in 1 : vector<8x32xf32>, vector<8x32xf32> -> vector<8x64xf32>
    %cst_48 = arith.constant dense<0.000000e+00> : vector<8x128xf32>
    %267 = tpu.matmul %266, %7, %cst_48 {dimension_numbers = #tpu.dot_dimension_numbers<[1], [0], [0], [1], [0, 0, 1, 1], [], []>} : vector<8x64xf32>, vector<64x128xf32>, vector<8x128xf32> -> vector<8x128xf32>
    %268 = vector.broadcast %8 : vector<1x128xf32> to vector<8x128xf32>
    %269 = arith.addf %267, %268 : vector<8x128xf32>
    %270 = vector.extract_strided_slice %269 {offsets = [0, 0], sizes = [8, 32], strides = [1, 1]} : vector<8x128xf32> to vector<8x32xf32>
    %271 = arith.negf %270 : vector<8x32xf32>
    %272 = math.exp %271 : vector<8x32xf32>
    %cst_49 = arith.constant 1.000000e+00 : f32
    %273 = vector.broadcast %cst_49 : f32 to vector<8x32xf32>
    %274 = arith.addf %273, %272 : vector<8x32xf32>
    %275 = arith.divf %273, %274 : vector<8x32xf32>
    %276 = vector.extract_strided_slice %269 {offsets = [0, 32], sizes = [8, 32], strides = [1, 1]} : vector<8x128xf32> to vector<8x32xf32>
    %277 = arith.negf %276 : vector<8x32xf32>
    %278 = math.exp %277 : vector<8x32xf32>
    %cst_50 = arith.constant 1.000000e+00 : f32
    %279 = vector.broadcast %cst_50 : f32 to vector<8x32xf32>
    %280 = arith.addf %279, %278 : vector<8x32xf32>
    %281 = arith.divf %279, %280 : vector<8x32xf32>
    %282 = vector.extract_strided_slice %269 {offsets = [0, 64], sizes = [8, 32], strides = [1, 1]} : vector<8x128xf32> to vector<8x32xf32>
    %283 = math.tanh %282 : vector<8x32xf32>
    %284 = vector.extract_strided_slice %269 {offsets = [0, 96], sizes = [8, 32], strides = [1, 1]} : vector<8x128xf32> to vector<8x32xf32>
    %285 = arith.negf %284 : vector<8x32xf32>
    %286 = math.exp %285 : vector<8x32xf32>
    %cst_51 = arith.constant 1.000000e+00 : f32
    %287 = vector.broadcast %cst_51 : f32 to vector<8x32xf32>
    %288 = arith.addf %287, %286 : vector<8x32xf32>
    %289 = arith.divf %287, %288 : vector<8x32xf32>
    %290 = arith.mulf %281, %235 : vector<8x32xf32>
    %291 = arith.mulf %275, %283 : vector<8x32xf32>
    %292 = arith.addf %290, %291 : vector<8x32xf32>
    %293 = math.tanh %292 : vector<8x32xf32>
    %294 = arith.mulf %289, %293 : vector<8x32xf32>
    %295 = vector.extract_strided_slice %5 {offsets = [40, 0], sizes = [8, 128], strides = [1, 1]} : vector<64x128xf32> to vector<8x128xf32>
    %cst_52 = arith.constant dense<0.000000e+00> : vector<8x128xf32>
    %296 = tpu.matmul %265, %6, %cst_52 {dimension_numbers = #tpu.dot_dimension_numbers<[1], [0], [0], [1], [0, 0, 1, 1], [], []>} : vector<8x32xf32>, vector<32x128xf32>, vector<8x128xf32> -> vector<8x128xf32>
    %297 = arith.addf %295, %296 : vector<8x128xf32>
    %298 = vector.extract_strided_slice %297 {offsets = [0, 0], sizes = [8, 32], strides = [1, 1]} : vector<8x128xf32> to vector<8x32xf32>
    %299 = arith.negf %298 : vector<8x32xf32>
    %300 = math.exp %299 : vector<8x32xf32>
    %cst_53 = arith.constant 1.000000e+00 : f32
    %301 = vector.broadcast %cst_53 : f32 to vector<8x32xf32>
    %302 = arith.addf %301, %300 : vector<8x32xf32>
    %303 = arith.divf %301, %302 : vector<8x32xf32>
    %304 = vector.extract_strided_slice %297 {offsets = [0, 32], sizes = [8, 32], strides = [1, 1]} : vector<8x128xf32> to vector<8x32xf32>
    %305 = arith.negf %304 : vector<8x32xf32>
    %306 = math.exp %305 : vector<8x32xf32>
    %cst_54 = arith.constant 1.000000e+00 : f32
    %307 = vector.broadcast %cst_54 : f32 to vector<8x32xf32>
    %308 = arith.addf %307, %306 : vector<8x32xf32>
    %309 = arith.divf %307, %308 : vector<8x32xf32>
    %310 = vector.extract_strided_slice %297 {offsets = [0, 64], sizes = [8, 32], strides = [1, 1]} : vector<8x128xf32> to vector<8x32xf32>
    %311 = math.tanh %310 : vector<8x32xf32>
    %312 = vector.extract_strided_slice %297 {offsets = [0, 96], sizes = [8, 32], strides = [1, 1]} : vector<8x128xf32> to vector<8x32xf32>
    %313 = arith.negf %312 : vector<8x32xf32>
    %314 = math.exp %313 : vector<8x32xf32>
    %cst_55 = arith.constant 1.000000e+00 : f32
    %315 = vector.broadcast %cst_55 : f32 to vector<8x32xf32>
    %316 = arith.addf %315, %314 : vector<8x32xf32>
    %317 = arith.divf %315, %316 : vector<8x32xf32>
    %318 = arith.mulf %309, %263 : vector<8x32xf32>
    %319 = arith.mulf %303, %311 : vector<8x32xf32>
    %320 = arith.addf %318, %319 : vector<8x32xf32>
    %321 = math.tanh %320 : vector<8x32xf32>
    %322 = arith.mulf %317, %321 : vector<8x32xf32>
    %323 = tpu.concatenate %322, %294 in 1 : vector<8x32xf32>, vector<8x32xf32> -> vector<8x64xf32>
    %cst_56 = arith.constant dense<0.000000e+00> : vector<8x128xf32>
    %324 = tpu.matmul %323, %7, %cst_56 {dimension_numbers = #tpu.dot_dimension_numbers<[1], [0], [0], [1], [0, 0, 1, 1], [], []>} : vector<8x64xf32>, vector<64x128xf32>, vector<8x128xf32> -> vector<8x128xf32>
    %325 = vector.broadcast %8 : vector<1x128xf32> to vector<8x128xf32>
    %326 = arith.addf %324, %325 : vector<8x128xf32>
    %327 = vector.extract_strided_slice %326 {offsets = [0, 0], sizes = [8, 32], strides = [1, 1]} : vector<8x128xf32> to vector<8x32xf32>
    %328 = arith.negf %327 : vector<8x32xf32>
    %329 = math.exp %328 : vector<8x32xf32>
    %cst_57 = arith.constant 1.000000e+00 : f32
    %330 = vector.broadcast %cst_57 : f32 to vector<8x32xf32>
    %331 = arith.addf %330, %329 : vector<8x32xf32>
    %332 = arith.divf %330, %331 : vector<8x32xf32>
    %333 = vector.extract_strided_slice %326 {offsets = [0, 32], sizes = [8, 32], strides = [1, 1]} : vector<8x128xf32> to vector<8x32xf32>
    %334 = arith.negf %333 : vector<8x32xf32>
    %335 = math.exp %334 : vector<8x32xf32>
    %cst_58 = arith.constant 1.000000e+00 : f32
    %336 = vector.broadcast %cst_58 : f32 to vector<8x32xf32>
    %337 = arith.addf %336, %335 : vector<8x32xf32>
    %338 = arith.divf %336, %337 : vector<8x32xf32>
    %339 = vector.extract_strided_slice %326 {offsets = [0, 64], sizes = [8, 32], strides = [1, 1]} : vector<8x128xf32> to vector<8x32xf32>
    %340 = math.tanh %339 : vector<8x32xf32>
    %341 = vector.extract_strided_slice %326 {offsets = [0, 96], sizes = [8, 32], strides = [1, 1]} : vector<8x128xf32> to vector<8x32xf32>
    %342 = arith.negf %341 : vector<8x32xf32>
    %343 = math.exp %342 : vector<8x32xf32>
    %cst_59 = arith.constant 1.000000e+00 : f32
    %344 = vector.broadcast %cst_59 : f32 to vector<8x32xf32>
    %345 = arith.addf %344, %343 : vector<8x32xf32>
    %346 = arith.divf %344, %345 : vector<8x32xf32>
    %347 = arith.mulf %338, %292 : vector<8x32xf32>
    %348 = arith.mulf %332, %340 : vector<8x32xf32>
    %349 = arith.addf %347, %348 : vector<8x32xf32>
    %350 = math.tanh %349 : vector<8x32xf32>
    %351 = arith.mulf %346, %350 : vector<8x32xf32>
    %352 = vector.extract_strided_slice %5 {offsets = [48, 0], sizes = [8, 128], strides = [1, 1]} : vector<64x128xf32> to vector<8x128xf32>
    %cst_60 = arith.constant dense<0.000000e+00> : vector<8x128xf32>
    %353 = tpu.matmul %322, %6, %cst_60 {dimension_numbers = #tpu.dot_dimension_numbers<[1], [0], [0], [1], [0, 0, 1, 1], [], []>} : vector<8x32xf32>, vector<32x128xf32>, vector<8x128xf32> -> vector<8x128xf32>
    %354 = arith.addf %352, %353 : vector<8x128xf32>
    %355 = vector.extract_strided_slice %354 {offsets = [0, 0], sizes = [8, 32], strides = [1, 1]} : vector<8x128xf32> to vector<8x32xf32>
    %356 = arith.negf %355 : vector<8x32xf32>
    %357 = math.exp %356 : vector<8x32xf32>
    %cst_61 = arith.constant 1.000000e+00 : f32
    %358 = vector.broadcast %cst_61 : f32 to vector<8x32xf32>
    %359 = arith.addf %358, %357 : vector<8x32xf32>
    %360 = arith.divf %358, %359 : vector<8x32xf32>
    %361 = vector.extract_strided_slice %354 {offsets = [0, 32], sizes = [8, 32], strides = [1, 1]} : vector<8x128xf32> to vector<8x32xf32>
    %362 = arith.negf %361 : vector<8x32xf32>
    %363 = math.exp %362 : vector<8x32xf32>
    %cst_62 = arith.constant 1.000000e+00 : f32
    %364 = vector.broadcast %cst_62 : f32 to vector<8x32xf32>
    %365 = arith.addf %364, %363 : vector<8x32xf32>
    %366 = arith.divf %364, %365 : vector<8x32xf32>
    %367 = vector.extract_strided_slice %354 {offsets = [0, 64], sizes = [8, 32], strides = [1, 1]} : vector<8x128xf32> to vector<8x32xf32>
    %368 = math.tanh %367 : vector<8x32xf32>
    %369 = vector.extract_strided_slice %354 {offsets = [0, 96], sizes = [8, 32], strides = [1, 1]} : vector<8x128xf32> to vector<8x32xf32>
    %370 = arith.negf %369 : vector<8x32xf32>
    %371 = math.exp %370 : vector<8x32xf32>
    %cst_63 = arith.constant 1.000000e+00 : f32
    %372 = vector.broadcast %cst_63 : f32 to vector<8x32xf32>
    %373 = arith.addf %372, %371 : vector<8x32xf32>
    %374 = arith.divf %372, %373 : vector<8x32xf32>
    %375 = arith.mulf %366, %320 : vector<8x32xf32>
    %376 = arith.mulf %360, %368 : vector<8x32xf32>
    %377 = arith.addf %375, %376 : vector<8x32xf32>
    %378 = math.tanh %377 : vector<8x32xf32>
    %379 = arith.mulf %374, %378 : vector<8x32xf32>
    %380 = tpu.concatenate %379, %351 in 1 : vector<8x32xf32>, vector<8x32xf32> -> vector<8x64xf32>
    %cst_64 = arith.constant dense<0.000000e+00> : vector<8x128xf32>
    %381 = tpu.matmul %380, %7, %cst_64 {dimension_numbers = #tpu.dot_dimension_numbers<[1], [0], [0], [1], [0, 0, 1, 1], [], []>} : vector<8x64xf32>, vector<64x128xf32>, vector<8x128xf32> -> vector<8x128xf32>
    %382 = vector.broadcast %8 : vector<1x128xf32> to vector<8x128xf32>
    %383 = arith.addf %381, %382 : vector<8x128xf32>
    %384 = vector.extract_strided_slice %383 {offsets = [0, 0], sizes = [8, 32], strides = [1, 1]} : vector<8x128xf32> to vector<8x32xf32>
    %385 = arith.negf %384 : vector<8x32xf32>
    %386 = math.exp %385 : vector<8x32xf32>
    %cst_65 = arith.constant 1.000000e+00 : f32
    %387 = vector.broadcast %cst_65 : f32 to vector<8x32xf32>
    %388 = arith.addf %387, %386 : vector<8x32xf32>
    %389 = arith.divf %387, %388 : vector<8x32xf32>
    %390 = vector.extract_strided_slice %383 {offsets = [0, 32], sizes = [8, 32], strides = [1, 1]} : vector<8x128xf32> to vector<8x32xf32>
    %391 = arith.negf %390 : vector<8x32xf32>
    %392 = math.exp %391 : vector<8x32xf32>
    %cst_66 = arith.constant 1.000000e+00 : f32
    %393 = vector.broadcast %cst_66 : f32 to vector<8x32xf32>
    %394 = arith.addf %393, %392 : vector<8x32xf32>
    %395 = arith.divf %393, %394 : vector<8x32xf32>
    %396 = vector.extract_strided_slice %383 {offsets = [0, 64], sizes = [8, 32], strides = [1, 1]} : vector<8x128xf32> to vector<8x32xf32>
    %397 = math.tanh %396 : vector<8x32xf32>
    %398 = vector.extract_strided_slice %383 {offsets = [0, 96], sizes = [8, 32], strides = [1, 1]} : vector<8x128xf32> to vector<8x32xf32>
    %399 = arith.negf %398 : vector<8x32xf32>
    %400 = math.exp %399 : vector<8x32xf32>
    %cst_67 = arith.constant 1.000000e+00 : f32
    %401 = vector.broadcast %cst_67 : f32 to vector<8x32xf32>
    %402 = arith.addf %401, %400 : vector<8x32xf32>
    %403 = arith.divf %401, %402 : vector<8x32xf32>
    %404 = arith.mulf %395, %349 : vector<8x32xf32>
    %405 = arith.mulf %389, %397 : vector<8x32xf32>
    %406 = arith.addf %404, %405 : vector<8x32xf32>
    %407 = math.tanh %406 : vector<8x32xf32>
    %408 = arith.mulf %403, %407 : vector<8x32xf32>
    %409 = vector.extract_strided_slice %5 {offsets = [56, 0], sizes = [8, 128], strides = [1, 1]} : vector<64x128xf32> to vector<8x128xf32>
    %cst_68 = arith.constant dense<0.000000e+00> : vector<8x128xf32>
    %410 = tpu.matmul %379, %6, %cst_68 {dimension_numbers = #tpu.dot_dimension_numbers<[1], [0], [0], [1], [0, 0, 1, 1], [], []>} : vector<8x32xf32>, vector<32x128xf32>, vector<8x128xf32> -> vector<8x128xf32>
    %411 = arith.addf %409, %410 : vector<8x128xf32>
    %412 = vector.extract_strided_slice %411 {offsets = [0, 0], sizes = [8, 32], strides = [1, 1]} : vector<8x128xf32> to vector<8x32xf32>
    %413 = arith.negf %412 : vector<8x32xf32>
    %414 = math.exp %413 : vector<8x32xf32>
    %cst_69 = arith.constant 1.000000e+00 : f32
    %415 = vector.broadcast %cst_69 : f32 to vector<8x32xf32>
    %416 = arith.addf %415, %414 : vector<8x32xf32>
    %417 = arith.divf %415, %416 : vector<8x32xf32>
    %418 = vector.extract_strided_slice %411 {offsets = [0, 32], sizes = [8, 32], strides = [1, 1]} : vector<8x128xf32> to vector<8x32xf32>
    %419 = arith.negf %418 : vector<8x32xf32>
    %420 = math.exp %419 : vector<8x32xf32>
    %cst_70 = arith.constant 1.000000e+00 : f32
    %421 = vector.broadcast %cst_70 : f32 to vector<8x32xf32>
    %422 = arith.addf %421, %420 : vector<8x32xf32>
    %423 = arith.divf %421, %422 : vector<8x32xf32>
    %424 = vector.extract_strided_slice %411 {offsets = [0, 64], sizes = [8, 32], strides = [1, 1]} : vector<8x128xf32> to vector<8x32xf32>
    %425 = math.tanh %424 : vector<8x32xf32>
    %426 = vector.extract_strided_slice %411 {offsets = [0, 96], sizes = [8, 32], strides = [1, 1]} : vector<8x128xf32> to vector<8x32xf32>
    %427 = arith.negf %426 : vector<8x32xf32>
    %428 = math.exp %427 : vector<8x32xf32>
    %cst_71 = arith.constant 1.000000e+00 : f32
    %429 = vector.broadcast %cst_71 : f32 to vector<8x32xf32>
    %430 = arith.addf %429, %428 : vector<8x32xf32>
    %431 = arith.divf %429, %430 : vector<8x32xf32>
    %432 = arith.mulf %423, %377 : vector<8x32xf32>
    %433 = arith.mulf %417, %425 : vector<8x32xf32>
    %434 = arith.addf %432, %433 : vector<8x32xf32>
    %435 = math.tanh %434 : vector<8x32xf32>
    %436 = arith.mulf %431, %435 : vector<8x32xf32>
    %437 = tpu.concatenate %436, %408 in 1 : vector<8x32xf32>, vector<8x32xf32> -> vector<8x64xf32>
    %cst_72 = arith.constant dense<0.000000e+00> : vector<8x128xf32>
    %438 = tpu.matmul %437, %7, %cst_72 {dimension_numbers = #tpu.dot_dimension_numbers<[1], [0], [0], [1], [0, 0, 1, 1], [], []>} : vector<8x64xf32>, vector<64x128xf32>, vector<8x128xf32> -> vector<8x128xf32>
    %439 = vector.broadcast %8 : vector<1x128xf32> to vector<8x128xf32>
    %440 = arith.addf %438, %439 : vector<8x128xf32>
    %441 = vector.extract_strided_slice %440 {offsets = [0, 0], sizes = [8, 32], strides = [1, 1]} : vector<8x128xf32> to vector<8x32xf32>
    %442 = arith.negf %441 : vector<8x32xf32>
    %443 = math.exp %442 : vector<8x32xf32>
    %cst_73 = arith.constant 1.000000e+00 : f32
    %444 = vector.broadcast %cst_73 : f32 to vector<8x32xf32>
    %445 = arith.addf %444, %443 : vector<8x32xf32>
    %446 = arith.divf %444, %445 : vector<8x32xf32>
    %447 = vector.extract_strided_slice %440 {offsets = [0, 32], sizes = [8, 32], strides = [1, 1]} : vector<8x128xf32> to vector<8x32xf32>
    %448 = arith.negf %447 : vector<8x32xf32>
    %449 = math.exp %448 : vector<8x32xf32>
    %cst_74 = arith.constant 1.000000e+00 : f32
    %450 = vector.broadcast %cst_74 : f32 to vector<8x32xf32>
    %451 = arith.addf %450, %449 : vector<8x32xf32>
    %452 = arith.divf %450, %451 : vector<8x32xf32>
    %453 = vector.extract_strided_slice %440 {offsets = [0, 64], sizes = [8, 32], strides = [1, 1]} : vector<8x128xf32> to vector<8x32xf32>
    %454 = math.tanh %453 : vector<8x32xf32>
    %455 = vector.extract_strided_slice %440 {offsets = [0, 96], sizes = [8, 32], strides = [1, 1]} : vector<8x128xf32> to vector<8x32xf32>
    %456 = arith.negf %455 : vector<8x32xf32>
    %457 = math.exp %456 : vector<8x32xf32>
    %cst_75 = arith.constant 1.000000e+00 : f32
    %458 = vector.broadcast %cst_75 : f32 to vector<8x32xf32>
    %459 = arith.addf %458, %457 : vector<8x32xf32>
    %460 = arith.divf %458, %459 : vector<8x32xf32>
    %461 = arith.mulf %452, %406 : vector<8x32xf32>
    %462 = arith.mulf %446, %454 : vector<8x32xf32>
    %463 = arith.addf %461, %462 : vector<8x32xf32>
    %464 = math.tanh %463 : vector<8x32xf32>
    %465 = arith.mulf %460, %464 : vector<8x32xf32>
    %c0_76 = arith.constant 0 : index
    %c0_77 = arith.constant 0 : index
    %466 = vector.load %arg6[%c0_76, %c0_77] : memref<32x128xf32, #tpu.memory_space<vmem>>, vector<32x128xf32>
    %cst_78 = arith.constant dense<0.000000e+00> : vector<8x128xf32>
    %467 = tpu.matmul %465, %466, %cst_78 {dimension_numbers = #tpu.dot_dimension_numbers<[1], [0], [0], [1], [0, 0, 1, 1], [], []>} : vector<8x32xf32>, vector<32x128xf32>, vector<8x128xf32> -> vector<8x128xf32>
    %c0_79 = arith.constant 0 : index
    %c0_80 = arith.constant 0 : index
    %468 = vector.load %arg7[%c0_79, %c0_80] : memref<1x128xf32, #tpu.memory_space<vmem>>, vector<1x128xf32>
    %469 = vector.broadcast %468 : vector<1x128xf32> to vector<8x128xf32>
    %470 = arith.addf %467, %469 : vector<8x128xf32>
    %c0_81 = arith.constant 0 : index
    %c0_82 = arith.constant 0 : index
    %471 = vector.load %arg8[%c0_81, %c0_82] : memref<8x128xf32, #tpu.memory_space<vmem>>, vector<8x128xf32>
    tpu.vector_store %arg8[%c0_81, %c0_82], %470 {strides = array<i32>} : memref<8x128xf32, #tpu.memory_space<vmem>>, vector<8x128xf32>,
    return
  }
}

</mosaic_0001>

<llo_original>
// kernel: tpu_custom_call.1
$region0: #{tpu_custom_call.1}
  #allocation0 [shape = 'u32[]', space=smem, size = 0x4, offset = 0x4, fixed_abs, tag = 'smem constant byte address 0x4 - core index']
  #allocation1 [shape = 'u32[144,128]{1,0:T(1,128)}', space=vmem, size = 0x12000, scoped, tag = 'internal scratch']
  %s0 = inlined_call_operand.vmem [shape: f32[64,4], index: 0, kind: input, shape index: {}]
  %s1 = inlined_call_operand.vmem [shape: f32[4,128], index: 1, kind: input, shape index: {}]
  %s2 = inlined_call_operand.hbm [shape: f32[32,128], index: 2, kind: input, shape index: {}]
  %s3 = inlined_call_operand.vmem [shape: f32[1,128], index: 3, kind: input, shape index: {}]
  %s4 = inlined_call_operand.vmem [shape: f32[64,128], index: 4, kind: input, shape index: {}]
  %s5 = inlined_call_operand.vmem [shape: f32[1,128], index: 5, kind: input, shape index: {}]
  %s6 = inlined_call_operand.hbm [shape: f32[32,128], index: 6, kind: input, shape index: {}]
  %s7 = inlined_call_operand.vmem [shape: f32[1,128], index: 7, kind: input, shape index: {}]
  %s8 = inlined_call_operand.hbm [shape: f32[8,128], index: 8, kind: output, shape index: {}]
  %s9 = sld [smem:[#allocation0]]
  $region50: #{tpu_custom_call.1} parent=0
    _
  %s11 = ssub.s32 1, %s9
  %s12 = scalar_select 0, %s11, %s9
  $region1: #{tpu_custom_call.1} parent=0
    #allocation2 [shape = 'u8[16384]{0}', space=vmem, size = 0x4000, scoped, tag = 'input window, operand 2, single buffered']
    #allocation3 [shape = 's32[1]{0}', space=sflag, size = 0x4, scoped, tag = 'scoped memory for tpu_custom_call.1']
    #allocation4 [shape = 's32[1]{0}', space=sflag, size = 0x4, scoped, tag = 'scoped memory for tpu_custom_call.1']
    #allocation5 [shape = 'u8[16384]{0}', space=vmem, size = 0x4000, scoped, tag = 'input window, operand 6, single buffered']
    #allocation6 [shape = 's32[1]{0}', space=sflag, size = 0x4, scoped, tag = 'scoped memory for tpu_custom_call.1']
    #allocation7 [shape = 'u8[4096]{0}', space=vmem, size = 0x1000, scoped, tag = 'output window, operand 0, single buffered']
    %13 = vsyncpa [#allocation3], 0
    %14 = vsyncpa [#allocation6], 0
    %15 = vsyncpa [#allocation4], 0
    // Predicated region
    $region2: #{tpu_custom_call.1} parent=1 // pred_check
      _
    $region3: #{tpu_custom_call.1} parent=1 // pred_check_branch
      %17 = sbr.rel (0) target = $region5
    $region4: #{tpu_custom_call.1} parent=1 // pred_region
      _
    $region5: #{tpu_custom_call.1} parent=1 // pred_fallthru
      _
    // Predicated region
    $region6: #{tpu_custom_call.1} parent=1 // pred_check
      _
    $region7: #{tpu_custom_call.1} parent=1 // pred_check_branch
      %19 = sbr.rel (0) target = $region9
    $region8: #{tpu_custom_call.1} parent=1 // pred_region
      _
    $region9: #{tpu_custom_call.1} parent=1 // pred_fallthru
      _
    // Predicated region
    $region10: #{tpu_custom_call.1} parent=1 // pred_check
      _
    $region11: #{tpu_custom_call.1} parent=1 // pred_check_branch
      %21 = sbr.rel (0) target = $region13
    $region12: #{tpu_custom_call.1} parent=1 // pred_region
      %s23 = ssub.s32 512, 512
      %24 = vsyncadd [#allocation3], %s23
      %s25 = sshll.u32 [#allocation2], 4
      %s26 = int_to_ptr.vmem [resolvable:$true] %s25
      %31 = dma.hbm_to_vmem [thread:$0]  %s2, 512, %s26, [#allocation3], 128, 128, 8
    $region13: #{tpu_custom_call.1} parent=1 // pred_fallthru
      _
    // Predicated region
    $region14: #{tpu_custom_call.1} parent=1 // pred_check
      _
    $region15: #{tpu_custom_call.1} parent=1 // pred_check_branch
      %33 = sbr.rel (0) target = $region17
    $region16: #{tpu_custom_call.1} parent=1 // pred_region
      _
    $region17: #{tpu_custom_call.1} parent=1 // pred_fallthru
      _
    // Predicated region
    $region18: #{tpu_custom_call.1} parent=1 // pred_check
      _
    $region19: #{tpu_custom_call.1} parent=1 // pred_check_branch
      %35 = sbr.rel (0) target = $region21
    $region20: #{tpu_custom_call.1} parent=1 // pred_region
      _
    $region21: #{tpu_custom_call.1} parent=1 // pred_fallthru
      _
    // Predicated region
    $region22: #{tpu_custom_call.1} parent=1 // pred_check
      _
    $region23: #{tpu_custom_call.1} parent=1 // pred_check_branch
      %37 = sbr.rel (0) target = $region25
    $region24: #{tpu_custom_call.1} parent=1 // pred_region
      _
    $region25: #{tpu_custom_call.1} parent=1 // pred_fallthru
      _
    // Predicated region
    $region26: #{tpu_custom_call.1} parent=1 // pred_check
      _
    $region27: #{tpu_custom_call.1} parent=1 // pred_check_branch
      %39 = sbr.rel (0) target = $region29
    $region28: #{tpu_custom_call.1} parent=1 // pred_region
      %s41 = ssub.s32 512, 512
      %42 = vsyncadd [#allocation6], %s41
      %s43 = sshll.u32 [#allocation5], 4
      %s44 = int_to_ptr.vmem [resolvable:$true] %s43
      %49 = dma.hbm_to_vmem [thread:$0]  %s6, 512, %s44, [#allocation6], 128, 128, 8
    $region29: #{tpu_custom_call.1} parent=1 // pred_fallthru
      _
    // Predicated region
    $region30: #{tpu_custom_call.1} parent=1 // pred_check
      _
    $region31: #{tpu_custom_call.1} parent=1 // pred_check_branch
      %51 = sbr.rel (0) target = $region33
    $region32: #{tpu_custom_call.1} parent=1 // pred_region
      _
    $region33: #{tpu_custom_call.1} parent=1 // pred_fallthru
      _
    // Predicated region
    $region34: #{tpu_custom_call.1} parent=1 // pred_check
      _
    $region35: #{tpu_custom_call.1} parent=1 // pred_check_branch
      %53 = sbr.rel (0) target = $region37
    $region36: #{tpu_custom_call.1} parent=1 // pred_region
      %54 = dma.done [#allocation3], 512
    $region37: #{tpu_custom_call.1} parent=1 // pred_fallthru
      _
    // Predicated region
    $region38: #{tpu_custom_call.1} parent=1 // pred_check
      _
    $region39: #{tpu_custom_call.1} parent=1 // pred_check_branch
      %56 = sbr.rel (0) target = $region41
    $region40: #{tpu_custom_call.1} parent=1 // pred_region
      %57 = dma.done [#allocation6], 512
    $region41: #{tpu_custom_call.1} parent=1 // pred_fallthru
      _
    %v58 = vld [vmem:[%s0] sm:$0xff]
    %v59 = vld [vmem:[%s0 + $0x8] sm:$0xff]
    %v60 = vld [vmem:[%s0 + $0x10] sm:$0xff]
    %v61 = vld [vmem:[%s0 + $0x18] sm:$0xff]
    %v62 = vld [vmem:[%s0 + $0x20] sm:$0xff]
    %v63 = vld [vmem:[%s0 + $0x28] sm:$0xff]
    %v64 = vld [vmem:[%s0 + $0x30] sm:$0xff]
    %v65 = vld [vmem:[%s0 + $0x38] sm:$0xff]
    %v66 = vld [vmem:[%s1] sm:$0xf]
    %v67 = vld [vmem:[%s3] sm:$0x1]
    %v69 = vlaneseq
    %v70 = vshrl.u32 %v69, 7
    %v71 = vsub.s32 0, %v70
    %v72 = vrot.slane %v67, %v71
    %vm74 = vcmask 31744
    %v76 = vsel %vm74, %v58, 0
    %v79 = vsel %vm74, %v59, 0
    %v82 = vsel %vm74, %v60, 0
    %v85 = vsel %vm74, %v61, 0
    %v88 = vsel %vm74, %v62, 0
    %v91 = vsel %vm74, %v63, 0
    %v94 = vsel %vm74, %v64, 0
    %v97 = vsel %vm74, %v65, 0
    %vm99 = vcmask 1043456
    %v101 = vsel %vm99, %v66, 0
    %103 = vmatprep.subr.mxu0 0.0
    %104 = vmatpush1.msra.mxu0 0.0
    %105 = vmatprep.subr.mxu0 0.0
    %106 = vmatpush1.msra.mxu0 0.0
    %107 = vmatprep.subr.mxu0 0.0
    %108 = vmatpush1.msra.mxu0 0.0
    %109 = vmatprep.subr.mxu0 0.0
    %110 = vmatpush1.msra.mxu0 0.0
    %111 = vmatprep.subr.mxu0 0.0
    %112 = vmatpush1.msra.mxu0 0.0
    %113 = vmatprep.subr.mxu0 0.0
    %114 = vmatpush1.msra.mxu0 0.0
    %115 = vmatprep.subr.mxu0 0.0
    %116 = vmatpush1.msra.mxu0 0.0
    %117 = vmatprep.subr.mxu0 0.0
    %118 = vmatpush1.msra.mxu0 0.0
    %119 = vmatprep.subr.mxu0 0.0
    %120 = vmatpush1.msra.mxu0 0.0
    %121 = vmatprep.subr.mxu0 0.0
    %122 = vmatpush1.msra.mxu0 0.0
    %123 = vmatprep.subr.mxu0 0.0
    %124 = vmatpush1.msra.mxu0 0.0
    %125 = vmatprep.subr.mxu0 0.0
    %126 = vmatpush1.msra.mxu0 0.0
    %127 = vmatprep.subr.mxu0 0.0
    %128 = vmatpush1.msra.mxu0 0.0
    %129 = vmatprep.subr.mxu0 0.0
    %130 = vmatpush1.msra.mxu0 0.0
    %131 = vmatprep.subr.mxu0 0.0
    %132 = vmatpush1.msra.mxu0 0.0
    %133 = vmatprep.subr.mxu0 0.0
    %134 = vmatpush1.msra.mxu0 %v101
    %135 = vmatprep.subr.mxu0 0.0
    %136 = vmatpush2.msra.mxu0 0.0
    %137 = vmatprep.subr.mxu0 0.0
    %138 = vmatpush2.msra.mxu0 0.0
    %139 = vmatprep.subr.mxu0 0.0
    %140 = vmatpush2.msra.mxu0 0.0
    %141 = vmatprep.subr.mxu0 0.0
    %142 = vmatpush2.msra.mxu0 0.0
    %143 = vmatprep.subr.mxu0 0.0
    %144 = vmatpush2.msra.mxu0 0.0
    %145 = vmatprep.subr.mxu0 0.0
    %146 = vmatpush2.msra.mxu0 0.0
    %147 = vmatprep.subr.mxu0 0.0
    %148 = vmatpush2.msra.mxu0 0.0
    %149 = vmatprep.subr.mxu0 0.0
    %150 = vmatpush2.msra.mxu0 0.0
    %151 = vmatprep.subr.mxu0 0.0
    %152 = vmatpush2.msra.mxu0 0.0
    %153 = vmatprep.subr.mxu0 0.0
    %154 = vmatpush2.msra.mxu0 0.0
    %155 = vmatprep.subr.mxu0 0.0
    %156 = vmatpush2.msra.mxu0 0.0
    %157 = vmatprep.subr.mxu0 0.0
    %158 = vmatpush2.msra.mxu0 0.0
    %159 = vmatprep.subr.mxu0 0.0
    %160 = vmatpush2.msra.mxu0 0.0
    %161 = vmatprep.subr.mxu0 0.0
    %162 = vmatpush2.msra.mxu0 0.0
    %163 = vmatprep.subr.mxu0 0.0
    %164 = vmatpush2.msra.mxu0 0.0
    %165 = vmatprep.subr.mxu0 0.0
    %166 = vmatpush2.msra.mxu0 0.0
    %167 = vmatprep.mubr.f32.mxu0 0.0
    %168 = vmatmul.mubr.f32.gmra.mxu0 %v76
    %v169 = vpop.f32.mrf.mxu0
    %v170 = vadd.f32 %v72, %v169
    %v171 = vpop.f32.mrf.mxu0
    %172 = vmatprep.mubr.f32.mxu0 0.0
    %173 = vmatmul.mubr.f32.gmra.mxu0 %v79
    %v174 = vpop.f32.mrf.mxu0
    %v175 = vadd.f32 %v72, %v174
    %v176 = vpop.f32.mrf.mxu0
    %177 = vmatprep.mubr.f32.mxu0 0.0
    %178 = vmatmul.mubr.f32.gmra.mxu0 %v82
    %v179 = vpop.f32.mrf.mxu0
    %v180 = vadd.f32 %v72, %v179
    %v181 = vpop.f32.mrf.mxu0
    %182 = vmatprep.mubr.f32.mxu0 0.0
    %183 = vmatmul.mubr.f32.gmra.mxu0 %v85
    %v184 = vpop.f32.mrf.mxu0
    %v185 = vadd.f32 %v72, %v184
    %v186 = vpop.f32.mrf.mxu0
    %187 = vmatprep.mubr.f32.mxu0 0.0
    %188 = vmatmul.mubr.f32.gmra.mxu0 %v88
    %v189 = vpop.f32.mrf.mxu0
    %v190 = vadd.f32 %v72, %v189
    %v191 = vpop.f32.mrf.mxu0
    %192 = vmatprep.mubr.f32.mxu0 0.0
    %193 = vmatmul.mubr.f32.gmra.mxu0 %v91
    %v194 = vpop.f32.mrf.mxu0
    %v195 = vadd.f32 %v72, %v194
    %v196 = vpop.f32.mrf.mxu0
    %197 = vmatprep.mubr.f32.mxu0 0.0
    %198 = vmatmul.mubr.f32.gmra.mxu0 %v94
    %v199 = vpop.f32.mrf.mxu0
    %v200 = vadd.f32 %v72, %v199
    %v201 = vpop.f32.mrf.mxu0
    %202 = vmatprep.mubr.f32.mxu0 0.0
    %203 = vmatmul.mubr.f32.gmra.mxu0 %v97
    %v204 = vpop.f32.mrf.mxu0
    %v205 = vadd.f32 %v72, %v204
    %v206 = vpop.f32.mrf.mxu0
    %207 = vdwg.mxu0
    %v208 = vld [vmem:[#allocation2] sm:$0xff]
    %v209 = vld [vmem:[#allocation2 + $0x8] sm:$0xff]
    %v210 = vld [vmem:[#allocation2 + $0x10] sm:$0xff]
    %v211 = vld [vmem:[#allocation2 + $0x18] sm:$0xff]
    %v212 = vld [vmem:[%s4] sm:$0xff]
    %v213 = vld [vmem:[%s4 + $0x8] sm:$0xff]
    %v214 = vld [vmem:[%s4 + $0x10] sm:$0xff]
    %v215 = vld [vmem:[%s4 + $0x18] sm:$0xff]
    %v216 = vld [vmem:[%s4 + $0x20] sm:$0xff]
    %v217 = vld [vmem:[%s4 + $0x28] sm:$0xff]
    %v218 = vld [vmem:[%s4 + $0x30] sm:$0xff]
    %v219 = vld [vmem:[%s4 + $0x38] sm:$0xff]
    %v220 = vld [vmem:[%s5] sm:$0x1]
    %vm221 = vcmask 261120
    %v223 = vsel %vm221, 0.0, 0
    %225 = vmatprep.subr.mxu0 0.0
    %226 = vmatpush1.msra.mxu0 0.0
    %227 = vmatprep.subr.mxu0 0.0
    %228 = vmatpush1.msra.mxu0 0.0
    %229 = vmatprep.subr.mxu0 0.0
    %230 = vmatpush1.msra.mxu0 0.0
    %231 = vmatprep.subr.mxu0 0.0
    %232 = vmatpush1.msra.mxu0 0.0
    %233 = vmatprep.subr.mxu0 0.0
    %234 = vmatpush1.msra.mxu0 0.0
    %235 = vmatprep.subr.mxu0 0.0
    %236 = vmatpush1.msra.mxu0 0.0
    %237 = vmatprep.subr.mxu0 0.0
    %238 = vmatpush1.msra.mxu0 0.0
    %239 = vmatprep.subr.mxu0 0.0
    %240 = vmatpush1.msra.mxu0 0.0
    %241 = vmatprep.subr.mxu0 0.0
    %242 = vmatpush1.msra.mxu0 0.0
    %243 = vmatprep.subr.mxu0 0.0
    %244 = vmatpush1.msra.mxu0 0.0
    %245 = vmatprep.subr.mxu0 0.0
    %246 = vmatpush1.msra.mxu0 0.0
    %247 = vmatprep.subr.mxu0 0.0
    %248 = vmatpush1.msra.mxu0 0.0
    %249 = vmatprep.subr.mxu0 0.0
    %250 = vmatpush1.msra.mxu0 %v211
    %251 = vmatprep.subr.mxu0 0.0
    %252 = vmatpush1.msra.mxu0 %v210
    %253 = vmatprep.subr.mxu0 0.0
    %254 = vmatpush1.msra.mxu0 %v209
    %255 = vmatprep.subr.mxu0 0.0
    %256 = vmatpush1.msra.mxu0 %v208
    %257 = vmatprep.subr.mxu0 0.0
    %258 = vmatpush2.msra.mxu0 0.0
    %259 = vmatprep.subr.mxu0 0.0
    %260 = vmatpush2.msra.mxu0 0.0
    %261 = vmatprep.subr.mxu0 0.0
    %262 = vmatpush2.msra.mxu0 0.0
    %263 = vmatprep.subr.mxu0 0.0
    %264 = vmatpush2.msra.mxu0 0.0
    %265 = vmatprep.subr.mxu0 0.0
    %266 = vmatpush2.msra.mxu0 0.0
    %267 = vmatprep.subr.mxu0 0.0
    %268 = vmatpush2.msra.mxu0 0.0
    %269 = vmatprep.subr.mxu0 0.0
    %270 = vmatpush2.msra.mxu0 0.0
    %271 = vmatprep.subr.mxu0 0.0
    %272 = vmatpush2.msra.mxu0 0.0
    %273 = vmatprep.subr.mxu0 0.0
    %274 = vmatpush2.msra.mxu0 0.0
    %275 = vmatprep.subr.mxu0 0.0
    %276 = vmatpush2.msra.mxu0 0.0
    %277 = vmatprep.subr.mxu0 0.0
    %278 = vmatpush2.msra.mxu0 0.0
    %279 = vmatprep.subr.mxu0 0.0
    %280 = vmatpush2.msra.mxu0 0.0
    %281 = vmatprep.subr.mxu0 0.0
    %282 = vmatpush2.msra.mxu0 0.0
    %283 = vmatprep.subr.mxu0 0.0
    %284 = vmatpush2.msra.mxu0 0.0
    %285 = vmatprep.subr.mxu0 0.0
    %286 = vmatpush2.msra.mxu0 0.0
    %287 = vmatprep.subr.mxu0 0.0
    %288 = vmatpush2.msra.mxu0 0.0
    %289 = vmatprep.mubr.f32.mxu0 0.0
    %290 = vmatmul.mubr.f32.gmra.mxu0 %v223
    %v291 = vpop.f32.mrf.mxu0
    %v292 = vadd.f32 0.0, %v291
    %v293 = vpop.f32.mrf.mxu0
    %294 = vdwg.mxu0
    %v295 = vadd.f32 %v170, %v292
    %v296 = vxor.u32 %v295, 2147483648
    %v297 = vmul.f32 %v296, 1.442695
    %v298 = vpow.pop %v297
    %v299 = vadd.f32 %v298, 1.0
    %v300 = vrcp.pop %v299
    %v301 = vmul.f32 1.0, %v300
    %v302 = vtanh.pop %v295
    %v303 = vmul.f32 %v301, 0.0
    %305 = vrot.lane.b32.xlu0 %v302, 64
    %v306 = vpop.permute.xlu0 %305
    %v308 = vmul.f32 %v301, %v306
    %310 = vrot.lane.b32.xlu0 %v308, 32
    %v311 = vpop.permute.xlu0 %310
    %v313 = vadd.f32 %v303, %v311
    %v314 = vtanh.pop %v313
    %316 = vrot.lane.b32.xlu0 %v314, 64
    %v317 = vpop.permute.xlu0 %316
    %v319 = vmul.f32 %v301, %v317
    %321 = vrot.lane.b32.xlu0 %v319, 32
    %v322 = vpop.permute.xlu0 %321
    %v324 = vsel %vm221, %v322, 0.0
    %v326 = vlaneseq
    %v327 = vshrl.u32 %v326, 7
    %v328 = vsub.s32 0, %v327
    %v329 = vrot.slane %v220, %v328
    %vm331 = vcmask 523264
    %v333 = vsel %vm331, %v324, 0
    %335 = vmatprep.subr.mxu0 0.0
    %336 = vmatpush1.msra.mxu0 0.0
    %337 = vmatprep.subr.mxu0 0.0
    %338 = vmatpush1.msra.mxu0 0.0
    %339 = vmatprep.subr.mxu0 0.0
    %340 = vmatpush1.msra.mxu0 0.0
    %341 = vmatprep.subr.mxu0 0.0
    %342 = vmatpush1.msra.mxu0 0.0
    %343 = vmatprep.subr.mxu0 0.0
    %344 = vmatpush1.msra.mxu0 0.0
    %345 = vmatprep.subr.mxu0 0.0
    %346 = vmatpush1.msra.mxu0 0.0
    %347 = vmatprep.subr.mxu0 0.0
    %348 = vmatpush1.msra.mxu0 0.0
    %349 = vmatprep.subr.mxu0 0.0
    %350 = vmatpush1.msra.mxu0 0.0
    %351 = vmatprep.subr.mxu0 0.0
    %352 = vmatpush1.msra.mxu0 %v219
    %353 = vmatprep.subr.mxu0 0.0
    %354 = vmatpush1.msra.mxu0 %v218
    %355 = vmatprep.subr.mxu0 0.0
    %356 = vmatpush1.msra.mxu0 %v217
    %357 = vmatprep.subr.mxu0 0.0
    %358 = vmatpush1.msra.mxu0 %v216
    %359 = vmatprep.subr.mxu0 0.0
    %360 = vmatpush1.msra.mxu0 %v215
    %361 = vmatprep.subr.mxu0 0.0
    %362 = vmatpush1.msra.mxu0 %v214
    %363 = vmatprep.subr.mxu0 0.0
    %364 = vmatpush1.msra.mxu0 %v213
    %365 = vmatprep.subr.mxu0 0.0
    %366 = vmatpush1.msra.mxu0 %v212
    %367 = vmatprep.subr.mxu0 0.0
    %368 = vmatpush2.msra.mxu0 0.0
    %369 = vmatprep.subr.mxu0 0.0
    %370 = vmatpush2.msra.mxu0 0.0
    %371 = vmatprep.subr.mxu0 0.0
    %372 = vmatpush2.msra.mxu0 0.0
    %373 = vmatprep.subr.mxu0 0.0
    %374 = vmatpush2.msra.mxu0 0.0
    %375 = vmatprep.subr.mxu0 0.0
    %376 = vmatpush2.msra.mxu0 0.0
    %377 = vmatprep.subr.mxu0 0.0
    %378 = vmatpush2.msra.mxu0 0.0
    %379 = vmatprep.subr.mxu0 0.0
    %380 = vmatpush2.msra.mxu0 0.0
    %381 = vmatprep.subr.mxu0 0.0
    %382 = vmatpush2.msra.mxu0 0.0
    %383 = vmatprep.subr.mxu0 0.0
    %384 = vmatpush2.msra.mxu0 0.0
    %385 = vmatprep.subr.mxu0 0.0
    %386 = vmatpush2.msra.mxu0 0.0
    %387 = vmatprep.subr.mxu0 0.0
    %388 = vmatpush2.msra.mxu0 0.0
    %389 = vmatprep.subr.mxu0 0.0
    %390 = vmatpush2.msra.mxu0 0.0
    %391 = vmatprep.subr.mxu0 0.0
    %392 = vmatpush2.msra.mxu0 0.0
    %393 = vmatprep.subr.mxu0 0.0
    %394 = vmatpush2.msra.mxu0 0.0
    %395 = vmatprep.subr.mxu0 0.0
    %396 = vmatpush2.msra.mxu0 0.0
    %397 = vmatprep.subr.mxu0 0.0
    %398 = vmatpush2.msra.mxu0 0.0
    %399 = vmatprep.mubr.f32.mxu0 0.0
    %400 = vmatmul.mubr.f32.gmra.mxu0 %v333
    %v401 = vpop.f32.mrf.mxu0
    %v402 = vadd.f32 %v329, %v401
    %v403 = vpop.f32.mrf.mxu0
    %404 = vdwg.mxu0
    %v405 = vxor.u32 %v402, 2147483648
    %v406 = vmul.f32 %v405, 1.442695
    %v407 = vpow.pop %v406
    %v408 = vadd.f32 %v407, 1.0
    %v409 = vrcp.pop %v408
    %v410 = vmul.f32 1.0, %v409
    %v411 = vtanh.pop %v402
    %v412 = vmul.f32 %v410, 0.0
    %414 = vrot.lane.b32.xlu0 %v411, 64
    %v415 = vpop.permute.xlu0 %414
    %v417 = vmul.f32 %v410, %v415
    %419 = vrot.lane.b32.xlu0 %v417, 32
    %v420 = vpop.permute.xlu0 %419
    %v422 = vadd.f32 %v412, %v420
    %v423 = vtanh.pop %v422
    %425 = vrot.lane.b32.xlu0 %v423, 64
    %v426 = vpop.permute.xlu0 %425
    %v428 = vmul.f32 %v410, %v426
    %v429 = vsel %vm221, %v322, 0
    %431 = vmatprep.subr.mxu0 0.0
    %432 = vmatpush1.msra.mxu0 0.0
    %433 = vmatprep.subr.mxu0 0.0
    %434 = vmatpush1.msra.mxu0 0.0
    %435 = vmatprep.subr.mxu0 0.0
    %436 = vmatpush1.msra.mxu0 0.0
    %437 = vmatprep.subr.mxu0 0.0
    %438 = vmatpush1.msra.mxu0 0.0
    %439 = vmatprep.subr.mxu0 0.0
    %440 = vmatpush1.msra.mxu0 0.0
    %441 = vmatprep.subr.mxu0 0.0
    %442 = vmatpush1.msra.mxu0 0.0
    %443 = vmatprep.subr.mxu0 0.0
    %444 = vmatpush1.msra.mxu0 0.0
    %445 = vmatprep.subr.mxu0 0.0
    %446 = vmatpush1.msra.mxu0 0.0
    %447 = vmatprep.subr.mxu0 0.0
    %448 = vmatpush1.msra.mxu0 0.0
    %449 = vmatprep.subr.mxu0 0.0
    %450 = vmatpush1.msra.mxu0 0.0
    %451 = vmatprep.subr.mxu0 0.0
    %452 = vmatpush1.msra.mxu0 0.0
    %453 = vmatprep.subr.mxu0 0.0
    %454 = vmatpush1.msra.mxu0 0.0
    %455 = vmatprep.subr.mxu0 0.0
    %456 = vmatpush1.msra.mxu0 %v211
    %457 = vmatprep.subr.mxu0 0.0
    %458 = vmatpush1.msra.mxu0 %v210
    %459 = vmatprep.subr.mxu0 0.0
    %460 = vmatpush1.msra.mxu0 %v209
    %461 = vmatprep.subr.mxu0 0.0
    %462 = vmatpush1.msra.mxu0 %v208
    %463 = vmatprep.subr.mxu0 0.0
    %464 = vmatpush2.msra.mxu0 0.0
    %465 = vmatprep.subr.mxu0 0.0
    %466 = vmatpush2.msra.mxu0 0.0
    %467 = vmatprep.subr.mxu0 0.0
    %468 = vmatpush2.msra.mxu0 0.0
    %469 = vmatprep.subr.mxu0 0.0
    %470 = vmatpush2.msra.mxu0 0.0
    %471 = vmatprep.subr.mxu0 0.0
    %472 = vmatpush2.msra.mxu0 0.0
    %473 = vmatprep.subr.mxu0 0.0
    %474 = vmatpush2.msra.mxu0 0.0
    %475 = vmatprep.subr.mxu0 0.0
    %476 = vmatpush2.msra.mxu0 0.0
    %477 = vmatprep.subr.mxu0 0.0
    %478 = vmatpush2.msra.mxu0 0.0
    %479 = vmatprep.subr.mxu0 0.0
    %480 = vmatpush2.msra.mxu0 0.0
    %481 = vmatprep.subr.mxu0 0.0
    %482 = vmatpush2.msra.mxu0 0.0
    %483 = vmatprep.subr.mxu0 0.0
    %484 = vmatpush2.msra.mxu0 0.0
    %485 = vmatprep.subr.mxu0 0.0
    %486 = vmatpush2.msra.mxu0 0.0
    %487 = vmatprep.subr.mxu0 0.0
    %488 = vmatpush2.msra.mxu0 0.0
    %489 = vmatprep.subr.mxu0 0.0
    %490 = vmatpush2.msra.mxu0 0.0
    %491 = vmatprep.subr.mxu0 0.0
    %492 = vmatpush2.msra.mxu0 0.0
    %493 = vmatprep.subr.mxu0 0.0
    %494 = vmatpush2.msra.mxu0 0.0
    %495 = vmatprep.mubr.f32.mxu0 0.0
    %496 = vmatmul.mubr.f32.gmra.mxu0 %v429
    %v497 = vpop.f32.mrf.mxu0
    %v498 = vadd.f32 0.0, %v497
    %v499 = vpop.f32.mrf.mxu0
    %500 = vdwg.mxu0
    %v501 = vadd.f32 %v175, %v498
    %v502 = vxor.u32 %v501, 2147483648
    %v503 = vmul.f32 %v502, 1.442695
    %v504 = vpow.pop %v503
    %v505 = vadd.f32 %v504, 1.0
    %v506 = vrcp.pop %v505
    %v507 = vmul.f32 1.0, %v506
    %v508 = vtanh.pop %v501
    %v509 = vmul.f32 %v507, %v313
    %511 = vrot.lane.b32.xlu0 %v508, 64
    %v512 = vpop.permute.xlu0 %511
    %v514 = vmul.f32 %v507, %v512
    %516 = vrot.lane.b32.xlu0 %v514, 32
    %v517 = vpop.permute.xlu0 %516
    %v519 = vadd.f32 %v509, %v517
    %v520 = vtanh.pop %v519
    %522 = vrot.lane.b32.xlu0 %v520, 64
    %v523 = vpop.permute.xlu0 %522
    %v525 = vmul.f32 %v507, %v523
    %527 = vrot.lane.b32.xlu0 %v525, 32
    %v528 = vpop.permute.xlu0 %527
    %531 = vrot.lane.b32.xlu0 %v428, 64
    %v532 = vpop.permute.xlu0 %531
    %v534 = vsel %vm221, %v528, %v532
    %v536 = vsel %vm331, %v534, 0
    %538 = vmatprep.subr.mxu0 0.0
    %539 = vmatpush1.msra.mxu0 0.0
    %540 = vmatprep.subr.mxu0 0.0
    %541 = vmatpush1.msra.mxu0 0.0
    %542 = vmatprep.subr.mxu0 0.0
    %543 = vmatpush1.msra.mxu0 0.0
    %544 = vmatprep.subr.mxu0 0.0
    %545 = vmatpush1.msra.mxu0 0.0
    %546 = vmatprep.subr.mxu0 0.0
    %547 = vmatpush1.msra.mxu0 0.0
    %548 = vmatprep.subr.mxu0 0.0
    %549 = vmatpush1.msra.mxu0 0.0
    %550 = vmatprep.subr.mxu0 0.0
    %551 = vmatpush1.msra.mxu0 0.0
    %552 = vmatprep.subr.mxu0 0.0
    %553 = vmatpush1.msra.mxu0 0.0
    %554 = vmatprep.subr.mxu0 0.0
    %555 = vmatpush1.msra.mxu0 %v219
    %556 = vmatprep.subr.mxu0 0.0
    %557 = vmatpush1.msra.mxu0 %v218
    %558 = vmatprep.subr.mxu0 0.0
    %559 = vmatpush1.msra.mxu0 %v217
    %560 = vmatprep.subr.mxu0 0.0
    %561 = vmatpush1.msra.mxu0 %v216
    %562 = vmatprep.subr.mxu0 0.0
    %563 = vmatpush1.msra.mxu0 %v215
    %564 = vmatprep.subr.mxu0 0.0
    %565 = vmatpush1.msra.mxu0 %v214
    %566 = vmatprep.subr.mxu0 0.0
    %567 = vmatpush1.msra.mxu0 %v213
    %568 = vmatprep.subr.mxu0 0.0
    %569 = vmatpush1.msra.mxu0 %v212
    %570 = vmatprep.subr.mxu0 0.0
    %571 = vmatpush2.msra.mxu0 0.0
    %572 = vmatprep.subr.mxu0 0.0
    %573 = vmatpush2.msra.mxu0 0.0
    %574 = vmatprep.subr.mxu0 0.0
    %575 = vmatpush2.msra.mxu0 0.0
    %576 = vmatprep.subr.mxu0 0.0
    %577 = vmatpush2.msra.mxu0 0.0
    %578 = vmatprep.subr.mxu0 0.0
    %579 = vmatpush2.msra.mxu0 0.0
    %580 = vmatprep.subr.mxu0 0.0
    %581 = vmatpush2.msra.mxu0 0.0
    %582 = vmatprep.subr.mxu0 0.0
    %583 = vmatpush2.msra.mxu0 0.0
    %584 = vmatprep.subr.mxu0 0.0
    %585 = vmatpush2.msra.mxu0 0.0
    %586 = vmatprep.subr.mxu0 0.0
    %587 = vmatpush2.msra.mxu0 0.0
    %588 = vmatprep.subr.mxu0 0.0
    %589 = vmatpush2.msra.mxu0 0.0
    %590 = vmatprep.subr.mxu0 0.0
    %591 = vmatpush2.msra.mxu0 0.0
    %592 = vmatprep.subr.mxu0 0.0
    %593 = vmatpush2.msra.mxu0 0.0
    %594 = vmatprep.subr.mxu0 0.0
    %595 = vmatpush2.msra.mxu0 0.0
    %596 = vmatprep.subr.mxu0 0.0
    %597 = vmatpush2.msra.mxu0 0.0
    %598 = vmatprep.subr.mxu0 0.0
    %599 = vmatpush2.msra.mxu0 0.0
    %600 = vmatprep.subr.mxu0 0.0
    %601 = vmatpush2.msra.mxu0 0.0
    %602 = vmatprep.mubr.f32.mxu0 0.0
    %603 = vmatmul.mubr.f32.gmra.mxu0 %v536
    %v604 = vpop.f32.mrf.mxu0
    %v605 = vadd.f32 %v329, %v604
    %v606 = vpop.f32.mrf.mxu0
    %607 = vdwg.mxu0
    %v608 = vxor.u32 %v605, 2147483648
    %v609 = vmul.f32 %v608, 1.442695
    %v610 = vpow.pop %v609
    %v611 = vadd.f32 %v610, 1.0
    %v612 = vrcp.pop %v611
    %v613 = vmul.f32 1.0, %v612
    %v614 = vtanh.pop %v605
    %v615 = vmul.f32 %v613, %v422
    %617 = vrot.lane.b32.xlu0 %v614, 64
    %v618 = vpop.permute.xlu0 %617
    %v620 = vmul.f32 %v613, %v618
    %622 = vrot.lane.b32.xlu0 %v620, 32
    %v623 = vpop.permute.xlu0 %622
    %v625 = vadd.f32 %v615, %v623
    %v626 = vtanh.pop %v625
    %628 = vrot.lane.b32.xlu0 %v626, 64
    %v629 = vpop.permute.xlu0 %628
    %v631 = vmul.f32 %v613, %v629
    %v632 = vsel %vm221, %v528, 0
    %634 = vmatprep.subr.mxu0 0.0
    %635 = vmatpush1.msra.mxu0 0.0
    %636 = vmatprep.subr.mxu0 0.0
    %637 = vmatpush1.msra.mxu0 0.0
    %638 = vmatprep.subr.mxu0 0.0
    %639 = vmatpush1.msra.mxu0 0.0
    %640 = vmatprep.subr.mxu0 0.0
    %641 = vmatpush1.msra.mxu0 0.0
    %642 = vmatprep.subr.mxu0 0.0
    %643 = vmatpush1.msra.mxu0 0.0
    %644 = vmatprep.subr.mxu0 0.0
    %645 = vmatpush1.msra.mxu0 0.0
    %646 = vmatprep.subr.mxu0 0.0
    %647 = vmatpush1.msra.mxu0 0.0
    %648 = vmatprep.subr.mxu0 0.0
    %649 = vmatpush1.msra.mxu0 0.0
    %650 = vmatprep.subr.mxu0 0.0
    %651 = vmatpush1.msra.mxu0 0.0
    %652 = vmatprep.subr.mxu0 0.0
    %653 = vmatpush1.msra.mxu0 0.0
    %654 = vmatprep.subr.mxu0 0.0
    %655 = vmatpush1.msra.mxu0 0.0
    %656 = vmatprep.subr.mxu0 0.0
    %657 = vmatpush1.msra.mxu0 0.0
    %658 = vmatprep.subr.mxu0 0.0
    %659 = vmatpush1.msra.mxu0 %v211
    %660 = vmatprep.subr.mxu0 0.0
    %661 = vmatpush1.msra.mxu0 %v210
    %662 = vmatprep.subr.mxu0 0.0
    %663 = vmatpush1.msra.mxu0 %v209
    %664 = vmatprep.subr.mxu0 0.0
    %665 = vmatpush1.msra.mxu0 %v208
    %666 = vmatprep.subr.mxu0 0.0
    %667 = vmatpush2.msra.mxu0 0.0
    %668 = vmatprep.subr.mxu0 0.0
    %669 = vmatpush2.msra.mxu0 0.0
    %670 = vmatprep.subr.mxu0 0.0
    %671 = vmatpush2.msra.mxu0 0.0
    %672 = vmatprep.subr.mxu0 0.0
    %673 = vmatpush2.msra.mxu0 0.0
    %674 = vmatprep.subr.mxu0 0.0
    %675 = vmatpush2.msra.mxu0 0.0
    %676 = vmatprep.subr.mxu0 0.0
    %677 = vmatpush2.msra.mxu0 0.0
    %678 = vmatprep.subr.mxu0 0.0
    %679 = vmatpush2.msra.mxu0 0.0
    %680 = vmatprep.subr.mxu0 0.0
    %681 = vmatpush2.msra.mxu0 0.0
    %682 = vmatprep.subr.mxu0 0.0
    %683 = vmatpush2.msra.mxu0 0.0
    %684 = vmatprep.subr.mxu0 0.0
    %685 = vmatpush2.msra.mxu0 0.0
    %686 = vmatprep.subr.mxu0 0.0
    %687 = vmatpush2.msra.mxu0 0.0
    %688 = vmatprep.subr.mxu0 0.0
    %689 = vmatpush2.msra.mxu0 0.0
    %690 = vmatprep.subr.mxu0 0.0
    %691 = vmatpush2.msra.mxu0 0.0
    %692 = vmatprep.subr.mxu0 0.0
    %693 = vmatpush2.msra.mxu0 0.0
    %694 = vmatprep.subr.mxu0 0.0
    %695 = vmatpush2.msra.mxu0 0.0
    %696 = vmatprep.subr.mxu0 0.0
    %697 = vmatpush2.msra.mxu0 0.0
    %698 = vmatprep.mubr.f32.mxu0 0.0
    %699 = vmatmul.mubr.f32.gmra.mxu0 %v632
    %v700 = vpop.f32.mrf.mxu0
    %v701 = vadd.f32 0.0, %v700
    %v702 = vpop.f32.mrf.mxu0
    %703 = vdwg.mxu0
    %v704 = vadd.f32 %v180, %v701
    %v705 = vxor.u32 %v704, 2147483648
    %v706 = vmul.f32 %v705, 1.442695
    %v707 = vpow.pop %v706
    %v708 = vadd.f32 %v707, 1.0
    %v709 = vrcp.pop %v708
    %v710 = vmul.f32 1.0, %v709
    %v711 = vtanh.pop %v704
    %v712 = vmul.f32 %v710, %v519
    %714 = vrot.lane.b32.xlu0 %v711, 64
    %v715 = vpop.permute.xlu0 %714
    %v717 = vmul.f32 %v710, %v715
    %719 = vrot.lane.b32.xlu0 %v717, 32
    %v720 = vpop.permute.xlu0 %719
    %v722 = vadd.f32 %v712, %v720
    %v723 = vtanh.pop %v722
    %725 = vrot.lane.b32.xlu0 %v723, 64
    %v726 = vpop.permute.xlu0 %725
    %v728 = vmul.f32 %v710, %v726
    %730 = vrot.lane.b32.xlu0 %v728, 32
    %v731 = vpop.permute.xlu0 %730
    %734 = vrot.lane.b32.xlu0 %v631, 64
    %v735 = vpop.permute.xlu0 %734
    %v737 = vsel %vm221, %v731, %v735
    %v739 = vsel %vm331, %v737, 0
    %741 = vmatprep.subr.mxu0 0.0
    %742 = vmatpush1.msra.mxu0 0.0
    %743 = vmatprep.subr.mxu0 0.0
    %744 = vmatpush1.msra.mxu0 0.0
    %745 = vmatprep.subr.mxu0 0.0
    %746 = vmatpush1.msra.mxu0 0.0
    %747 = vmatprep.subr.mxu0 0.0
    %748 = vmatpush1.msra.mxu0 0.0
    %749 = vmatprep.subr.mxu0 0.0
    %750 = vmatpush1.msra.mxu0 0.0
    %751 = vmatprep.subr.mxu0 0.0
    %752 = vmatpush1.msra.mxu0 0.0
    %753 = vmatprep.subr.mxu0 0.0
    %754 = vmatpush1.msra.mxu0 0.0
    %755 = vmatprep.subr.mxu0 0.0
    %756 = vmatpush1.msra.mxu0 0.0
    %757 = vmatprep.subr.mxu0 0.0
    %758 = vmatpush1.msra.mxu0 %v219
    %759 = vmatprep.subr.mxu0 0.0
    %760 = vmatpush1.msra.mxu0 %v218
    %761 = vmatprep.subr.mxu0 0.0
    %762 = vmatpush1.msra.mxu0 %v217
    %763 = vmatprep.subr.mxu0 0.0
    %764 = vmatpush1.msra.mxu0 %v216
    %765 = vmatprep.subr.mxu0 0.0
    %766 = vmatpush1.msra.mxu0 %v215
    %767 = vmatprep.subr.mxu0 0.0
    %768 = vmatpush1.msra.mxu0 %v214
    %769 = vmatprep.subr.mxu0 0.0
    %770 = vmatpush1.msra.mxu0 %v213
    %771 = vmatprep.subr.mxu0 0.0
    %772 = vmatpush1.msra.mxu0 %v212
    %773 = vmatprep.subr.mxu0 0.0
    %774 = vmatpush2.msra.mxu0 0.0
    %775 = vmatprep.subr.mxu0 0.0
    %776 = vmatpush2.msra.mxu0 0.0
    %777 = vmatprep.subr.mxu0 0.0
    %778 = vmatpush2.msra.mxu0 0.0
    %779 = vmatprep.subr.mxu0 0.0
    %780 = vmatpush2.msra.mxu0 0.0
    %781 = vmatprep.subr.mxu0 0.0
    %782 = vmatpush2.msra.mxu0 0.0
    %783 = vmatprep.subr.mxu0 0.0
    %784 = vmatpush2.msra.mxu0 0.0
    %785 = vmatprep.subr.mxu0 0.0
    %786 = vmatpush2.msra.mxu0 0.0
    %787 = vmatprep.subr.mxu0 0.0
    %788 = vmatpush2.msra.mxu0 0.0
    %789 = vmatprep.subr.mxu0 0.0
    %790 = vmatpush2.msra.mxu0 0.0
    %791 = vmatprep.subr.mxu0 0.0
    %792 = vmatpush2.msra.mxu0 0.0
    %793 = vmatprep.subr.mxu0 0.0
    %794 = vmatpush2.msra.mxu0 0.0
    %795 = vmatprep.subr.mxu0 0.0
    %796 = vmatpush2.msra.mxu0 0.0
    %797 = vmatprep.subr.mxu0 0.0
    %798 = vmatpush2.msra.mxu0 0.0
    %799 = vmatprep.subr.mxu0 0.0
    %800 = vmatpush2.msra.mxu0 0.0
    %801 = vmatprep.subr.mxu0 0.0
    %802 = vmatpush2.msra.mxu0 0.0
    %803 = vmatprep.subr.mxu0 0.0
    %804 = vmatpush2.msra.mxu0 0.0
    %805 = vmatprep.mubr.f32.mxu0 0.0
    %806 = vmatmul.mubr.f32.gmra.mxu0 %v739
    %v807 = vpop.f32.mrf.mxu0
    %v808 = vadd.f32 %v329, %v807
    %v809 = vpop.f32.mrf.mxu0
    %810 = vdwg.mxu0
    %v811 = vxor.u32 %v808, 2147483648
    %v812 = vmul.f32 %v811, 1.442695
    %v813 = vpow.pop %v812
    %v814 = vadd.f32 %v813, 1.0
    %v815 = vrcp.pop %v814
    %v816 = vmul.f32 1.0, %v815
    %v817 = vtanh.pop %v808
    %v818 = vmul.f32 %v816, %v625
    %820 = vrot.lane.b32.xlu0 %v817, 64
    %v821 = vpop.permute.xlu0 %820
    %v823 = vmul.f32 %v816, %v821
    %825 = vrot.lane.b32.xlu0 %v823, 32
    %v826 = vpop.permute.xlu0 %825
    %v828 = vadd.f32 %v818, %v826
    %v829 = vtanh.pop %v828
    %831 = vrot.lane.b32.xlu0 %v829, 64
    %v832 = vpop.permute.xlu0 %831
    %v834 = vmul.f32 %v816, %v832
    %v835 = vsel %vm221, %v731, 0
    %837 = vmatprep.subr.mxu0 0.0
    %838 = vmatpush1.msra.mxu0 0.0
    %839 = vmatprep.subr.mxu0 0.0
    %840 = vmatpush1.msra.mxu0 0.0
    %841 = vmatprep.subr.mxu0 0.0
    %842 = vmatpush1.msra.mxu0 0.0
    %843 = vmatprep.subr.mxu0 0.0
    %844 = vmatpush1.msra.mxu0 0.0
    %845 = vmatprep.subr.mxu0 0.0
    %846 = vmatpush1.msra.mxu0 0.0
    %847 = vmatprep.subr.mxu0 0.0
    %848 = vmatpush1.msra.mxu0 0.0
    %849 = vmatprep.subr.mxu0 0.0
    %850 = vmatpush1.msra.mxu0 0.0
    %851 = vmatprep.subr.mxu0 0.0
    %852 = vmatpush1.msra.mxu0 0.0
    %853 = vmatprep.subr.mxu0 0.0
    %854 = vmatpush1.msra.mxu0 0.0
    %855 = vmatprep.subr.mxu0 0.0
    %856 = vmatpush1.msra.mxu0 0.0
    %857 = vmatprep.subr.mxu0 0.0
    %858 = vmatpush1.msra.mxu0 0.0
    %859 = vmatprep.subr.mxu0 0.0
    %860 = vmatpush1.msra.mxu0 0.0
    %861 = vmatprep.subr.mxu0 0.0
    %862 = vmatpush1.msra.mxu0 %v211
    %863 = vmatprep.subr.mxu0 0.0
    %864 = vmatpush1.msra.mxu0 %v210
    %865 = vmatprep.subr.mxu0 0.0
    %866 = vmatpush1.msra.mxu0 %v209
    %867 = vmatprep.subr.mxu0 0.0
    %868 = vmatpush1.msra.mxu0 %v208
    %869 = vmatprep.subr.mxu0 0.0
    %870 = vmatpush2.msra.mxu0 0.0
    %871 = vmatprep.subr.mxu0 0.0
    %872 = vmatpush2.msra.mxu0 0.0
    %873 = vmatprep.subr.mxu0 0.0
    %874 = vmatpush2.msra.mxu0 0.0
    %875 = vmatprep.subr.mxu0 0.0
    %876 = vmatpush2.msra.mxu0 0.0
    %877 = vmatprep.subr.mxu0 0.0
    %878 = vmatpush2.msra.mxu0 0.0
    %879 = vmatprep.subr.mxu0 0.0
    %880 = vmatpush2.msra.mxu0 0.0
    %881 = vmatprep.subr.mxu0 0.0
    %882 = vmatpush2.msra.mxu0 0.0
    %883 = vmatprep.subr.mxu0 0.0
    %884 = vmatpush2.msra.mxu0 0.0
    %885 = vmatprep.subr.mxu0 0.0
    %886 = vmatpush2.msra.mxu0 0.0
    %887 = vmatprep.subr.mxu0 0.0
    %888 = vmatpush2.msra.mxu0 0.0
    %889 = vmatprep.subr.mxu0 0.0
    %890 = vmatpush2.msra.mxu0 0.0
    %891 = vmatprep.subr.mxu0 0.0
    %892 = vmatpush2.msra.mxu0 0.0
    %893 = vmatprep.subr.mxu0 0.0
    %894 = vmatpush2.msra.mxu0 0.0
    %895 = vmatprep.subr.mxu0 0.0
    %896 = vmatpush2.msra.mxu0 0.0
    %897 = vmatprep.subr.mxu0 0.0
    %898 = vmatpush2.msra.mxu0 0.0
    %899 = vmatprep.subr.mxu0 0.0
    %900 = vmatpush2.msra.mxu0 0.0
    %901 = vmatprep.mubr.f32.mxu0 0.0
    %902 = vmatmul.mubr.f32.gmra.mxu0 %v835
    %v903 = vpop.f32.mrf.mxu0
    %v904 = vadd.f32 0.0, %v903
    %v905 = vpop.f32.mrf.mxu0
    %906 = vdwg.mxu0
    %v907 = vadd.f32 %v185, %v904
    %v908 = vxor.u32 %v907, 2147483648
    %v909 = vmul.f32 %v908, 1.442695
    %v910 = vpow.pop %v909
    %v911 = vadd.f32 %v910, 1.0
    %v912 = vrcp.pop %v911
    %v913 = vmul.f32 1.0, %v912
    %v914 = vtanh.pop %v907
    %v915 = vmul.f32 %v913, %v722
    %917 = vrot.lane.b32.xlu0 %v914, 64
    %v918 = vpop.permute.xlu0 %917
    %v920 = vmul.f32 %v913, %v918
    %922 = vrot.lane.b32.xlu0 %v920, 32
    %v923 = vpop.permute.xlu0 %922
    %v925 = vadd.f32 %v915, %v923
    %v926 = vtanh.pop %v925
    %928 = vrot.lane.b32.xlu0 %v926, 64
    %v929 = vpop.permute.xlu0 %928
    %v931 = vmul.f32 %v913, %v929
    %933 = vrot.lane.b32.xlu0 %v931, 32
    %v934 = vpop.permute.xlu0 %933
    %937 = vrot.lane.b32.xlu0 %v834, 64
    %v938 = vpop.permute.xlu0 %937
    %v940 = vsel %vm221, %v934, %v938
    %v942 = vsel %vm331, %v940, 0
    %944 = vmatprep.subr.mxu0 0.0
    %945 = vmatpush1.msra.mxu0 0.0
    %946 = vmatprep.subr.mxu0 0.0
    %947 = vmatpush1.msra.mxu0 0.0
    %948 = vmatprep.subr.mxu0 0.0
    %949 = vmatpush1.msra.mxu0 0.0
    %950 = vmatprep.subr.mxu0 0.0
    %951 = vmatpush1.msra.mxu0 0.0
    %952 = vmatprep.subr.mxu0 0.0
    %953 = vmatpush1.msra.mxu0 0.0
    %954 = vmatprep.subr.mxu0 0.0
    %955 = vmatpush1.msra.mxu0 0.0
    %956 = vmatprep.subr.mxu0 0.0
    %957 = vmatpush1.msra.mxu0 0.0
    %958 = vmatprep.subr.mxu0 0.0
    %959 = vmatpush1.msra.mxu0 0.0
    %960 = vmatprep.subr.mxu0 0.0
    %961 = vmatpush1.msra.mxu0 %v219
    %962 = vmatprep.subr.mxu0 0.0
    %963 = vmatpush1.msra.mxu0 %v218
    %964 = vmatprep.subr.mxu0 0.0
    %965 = vmatpush1.msra.mxu0 %v217
    %966 = vmatprep.subr.mxu0 0.0
    %967 = vmatpush1.msra.mxu0 %v216
    %968 = vmatprep.subr.mxu0 0.0
    %969 = vmatpush1.msra.mxu0 %v215
    %970 = vmatprep.subr.mxu0 0.0
    %971 = vmatpush1.msra.mxu0 %v214
    %972 = vmatprep.subr.mxu0 0.0
    %973 = vmatpush1.msra.mxu0 %v213
    %974 = vmatprep.subr.mxu0 0.0
    %975 = vmatpush1.msra.mxu0 %v212
    %976 = vmatprep.subr.mxu0 0.0
    %977 = vmatpush2.msra.mxu0 0.0
    %978 = vmatprep.subr.mxu0 0.0
    %979 = vmatpush2.msra.mxu0 0.0
    %980 = vmatprep.subr.mxu0 0.0
    %981 = vmatpush2.msra.mxu0 0.0
    %982 = vmatprep.subr.mxu0 0.0
    %983 = vmatpush2.msra.mxu0 0.0
    %984 = vmatprep.subr.mxu0 0.0
    %985 = vmatpush2.msra.mxu0 0.0
    %986 = vmatprep.subr.mxu0 0.0
    %987 = vmatpush2.msra.mxu0 0.0
    %988 = vmatprep.subr.mxu0 0.0
    %989 = vmatpush2.msra.mxu0 0.0
    %990 = vmatprep.subr.mxu0 0.0
    %991 = vmatpush2.msra.mxu0 0.0
    %992 = vmatprep.subr.mxu0 0.0
    %993 = vmatpush2.msra.mxu0 0.0
    %994 = vmatprep.subr.mxu0 0.0
    %995 = vmatpush2.msra.mxu0 0.0
    %996 = vmatprep.subr.mxu0 0.0
    %997 = vmatpush2.msra.mxu0 0.0
    %998 = vmatprep.subr.mxu0 0.0
    %999 = vmatpush2.msra.mxu0 0.0
    %1000 = vmatprep.subr.mxu0 0.0
    %1001 = vmatpush2.msra.mxu0 0.0
    %1002 = vmatprep.subr.mxu0 0.0
    %1003 = vmatpush2.msra.mxu0 0.0
    %1004 = vmatprep.subr.mxu0 0.0
    %1005 = vmatpush2.msra.mxu0 0.0
    %1006 = vmatprep.subr.mxu0 0.0
    %1007 = vmatpush2.msra.mxu0 0.0
    %1008 = vmatprep.mubr.f32.mxu0 0.0
    %1009 = vmatmul.mubr.f32.gmra.mxu0 %v942
    %v1010 = vpop.f32.mrf.mxu0
    %v1011 = vadd.f32 %v329, %v1010
    %v1012 = vpop.f32.mrf.mxu0
    %1013 = vdwg.mxu0
    %v1014 = vxor.u32 %v1011, 2147483648
    %v1015 = vmul.f32 %v1014, 1.442695
    %v1016 = vpow.pop %v1015
    %v1017 = vadd.f32 %v1016, 1.0
    %v1018 = vrcp.pop %v1017
    %v1019 = vmul.f32 1.0, %v1018
    %v1020 = vtanh.pop %v1011
    %v1021 = vmul.f32 %v1019, %v828
    %1023 = vrot.lane.b32.xlu0 %v1020, 64
    %v1024 = vpop.permute.xlu0 %1023
    %v1026 = vmul.f32 %v1019, %v1024
    %1028 = vrot.lane.b32.xlu0 %v1026, 32
    %v1029 = vpop.permute.xlu0 %1028
    %v1031 = vadd.f32 %v1021, %v1029
    %v1032 = vtanh.pop %v1031
    %1034 = vrot.lane.b32.xlu0 %v1032, 64
    %v1035 = vpop.permute.xlu0 %1034
    %v1037 = vmul.f32 %v1019, %v1035
    %v1038 = vsel %vm221, %v934, 0
    %1040 = vmatprep.subr.mxu0 0.0
    %1041 = vmatpush1.msra.mxu0 0.0
    %1042 = vmatprep.subr.mxu0 0.0
    %1043 = vmatpush1.msra.mxu0 0.0
    %1044 = vmatprep.subr.mxu0 0.0
    %1045 = vmatpush1.msra.mxu0 0.0
    %1046 = vmatprep.subr.mxu0 0.0
    %1047 = vmatpush1.msra.mxu0 0.0
    %1048 = vmatprep.subr.mxu0 0.0
    %1049 = vmatpush1.msra.mxu0 0.0
    %1050 = vmatprep.subr.mxu0 0.0
    %1051 = vmatpush1.msra.mxu0 0.0
    %1052 = vmatprep.subr.mxu0 0.0
    %1053 = vmatpush1.msra.mxu0 0.0
    %1054 = vmatprep.subr.mxu0 0.0
    %1055 = vmatpush1.msra.mxu0 0.0
    %1056 = vmatprep.subr.mxu0 0.0
    %1057 = vmatpush1.msra.mxu0 0.0
    %1058 = vmatprep.subr.mxu0 0.0
    %1059 = vmatpush1.msra.mxu0 0.0
    %1060 = vmatprep.subr.mxu0 0.0
    %1061 = vmatpush1.msra.mxu0 0.0
    %1062 = vmatprep.subr.mxu0 0.0
    %1063 = vmatpush1.msra.mxu0 0.0
    %1064 = vmatprep.subr.mxu0 0.0
    %1065 = vmatpush1.msra.mxu0 %v211
    %1066 = vmatprep.subr.mxu0 0.0
    %1067 = vmatpush1.msra.mxu0 %v210
    %1068 = vmatprep.subr.mxu0 0.0
    %1069 = vmatpush1.msra.mxu0 %v209
    %1070 = vmatprep.subr.mxu0 0.0
    %1071 = vmatpush1.msra.mxu0 %v208
    %1072 = vmatprep.subr.mxu0 0.0
    %1073 = vmatpush2.msra.mxu0 0.0
    %1074 = vmatprep.subr.mxu0 0.0
    %1075 = vmatpush2.msra.mxu0 0.0
    %1076 = vmatprep.subr.mxu0 0.0
    %1077 = vmatpush2.msra.mxu0 0.0
    %1078 = vmatprep.subr.mxu0 0.0
    %1079 = vmatpush2.msra.mxu0 0.0
    %1080 = vmatprep.subr.mxu0 0.0
    %1081 = vmatpush2.msra.mxu0 0.0
    %1082 = vmatprep.subr.mxu0 0.0
    %1083 = vmatpush2.msra.mxu0 0.0
    %1084 = vmatprep.subr.mxu0 0.0
    %1085 = vmatpush2.msra.mxu0 0.0
    %1086 = vmatprep.subr.mxu0 0.0
    %1087 = vmatpush2.msra.mxu0 0.0
    %1088 = vmatprep.subr.mxu0 0.0
    %1089 = vmatpush2.msra.mxu0 0.0
    %1090 = vmatprep.subr.mxu0 0.0
    %1091 = vmatpush2.msra.mxu0 0.0
    %1092 = vmatprep.subr.mxu0 0.0
    %1093 = vmatpush2.msra.mxu0 0.0
    %1094 = vmatprep.subr.mxu0 0.0
    %1095 = vmatpush2.msra.mxu0 0.0
    %1096 = vmatprep.subr.mxu0 0.0
    %1097 = vmatpush2.msra.mxu0 0.0
    %1098 = vmatprep.subr.mxu0 0.0
    %1099 = vmatpush2.msra.mxu0 0.0
    %1100 = vmatprep.subr.mxu0 0.0
    %1101 = vmatpush2.msra.mxu0 0.0
    %1102 = vmatprep.subr.mxu0 0.0
    %1103 = vmatpush2.msra.mxu0 0.0
    %1104 = vmatprep.mubr.f32.mxu0 0.0
    %1105 = vmatmul.mubr.f32.gmra.mxu0 %v1038
    %v1106 = vpop.f32.mrf.mxu0
    %v1107 = vadd.f32 0.0, %v1106
    %v1108 = vpop.f32.mrf.mxu0
    %1109 = vdwg.mxu0
    %v1110 = vadd.f32 %v190, %v1107
    %v1111 = vxor.u32 %v1110, 2147483648
    %v1112 = vmul.f32 %v1111, 1.442695
    %v1113 = vpow.pop %v1112
    %v1114 = vadd.f32 %v1113, 1.0
    %v1115 = vrcp.pop %v1114
    %v1116 = vmul.f32 1.0, %v1115
    %v1117 = vtanh.pop %v1110
    %v1118 = vmul.f32 %v1116, %v925
    %1120 = vrot.lane.b32.xlu0 %v1117, 64
    %v1121 = vpop.permute.xlu0 %1120
    %v1123 = vmul.f32 %v1116, %v1121
    %1125 = vrot.lane.b32.xlu0 %v1123, 32
    %v1126 = vpop.permute.xlu0 %1125
    %v1128 = vadd.f32 %v1118, %v1126
    %v1129 = vtanh.pop %v1128
    %1131 = vrot.lane.b32.xlu0 %v1129, 64
    %v1132 = vpop.permute.xlu0 %1131
    %v1134 = vmul.f32 %v1116, %v1132
    %1136 = vrot.lane.b32.xlu0 %v1134, 32
    %v1137 = vpop.permute.xlu0 %1136
    %1140 = vrot.lane.b32.xlu0 %v1037, 64
    %v1141 = vpop.permute.xlu0 %1140
    %v1143 = vsel %vm221, %v1137, %v1141
    %v1145 = vsel %vm331, %v1143, 0
    %1147 = vmatprep.subr.mxu0 0.0
    %1148 = vmatpush1.msra.mxu0 0.0
    %1149 = vmatprep.subr.mxu0 0.0
    %1150 = vmatpush1.msra.mxu0 0.0
    %1151 = vmatprep.subr.mxu0 0.0
    %1152 = vmatpush1.msra.mxu0 0.0
    %1153 = vmatprep.subr.mxu0 0.0
    %1154 = vmatpush1.msra.mxu0 0.0
    %1155 = vmatprep.subr.mxu0 0.0
    %1156 = vmatpush1.msra.mxu0 0.0
    %1157 = vmatprep.subr.mxu0 0.0
    %1158 = vmatpush1.msra.mxu0 0.0
    %1159 = vmatprep.subr.mxu0 0.0
    %1160 = vmatpush1.msra.mxu0 0.0
    %1161 = vmatprep.subr.mxu0 0.0
    %1162 = vmatpush1.msra.mxu0 0.0
    %1163 = vmatprep.subr.mxu0 0.0
    %1164 = vmatpush1.msra.mxu0 %v219
    %1165 = vmatprep.subr.mxu0 0.0
    %1166 = vmatpush1.msra.mxu0 %v218
    %1167 = vmatprep.subr.mxu0 0.0
    %1168 = vmatpush1.msra.mxu0 %v217
    %1169 = vmatprep.subr.mxu0 0.0
    %1170 = vmatpush1.msra.mxu0 %v216
    %1171 = vmatprep.subr.mxu0 0.0
    %1172 = vmatpush1.msra.mxu0 %v215
    %1173 = vmatprep.subr.mxu0 0.0
    %1174 = vmatpush1.msra.mxu0 %v214
    %1175 = vmatprep.subr.mxu0 0.0
    %1176 = vmatpush1.msra.mxu0 %v213
    %1177 = vmatprep.subr.mxu0 0.0
    %1178 = vmatpush1.msra.mxu0 %v212
    %1179 = vmatprep.subr.mxu0 0.0
    %1180 = vmatpush2.msra.mxu0 0.0
    %1181 = vmatprep.subr.mxu0 0.0
    %1182 = vmatpush2.msra.mxu0 0.0
    %1183 = vmatprep.subr.mxu0 0.0
    %1184 = vmatpush2.msra.mxu0 0.0
    %1185 = vmatprep.subr.mxu0 0.0
    %1186 = vmatpush2.msra.mxu0 0.0
    %1187 = vmatprep.subr.mxu0 0.0
    %1188 = vmatpush2.msra.mxu0 0.0
    %1189 = vmatprep.subr.mxu0 0.0
    %1190 = vmatpush2.msra.mxu0 0.0
    %1191 = vmatprep.subr.mxu0 0.0
    %1192 = vmatpush2.msra.mxu0 0.0
    %1193 = vmatprep.subr.mxu0 0.0
    %1194 = vmatpush2.msra.mxu0 0.0
    %1195 = vmatprep.subr.mxu0 0.0
    %1196 = vmatpush2.msra.mxu0 0.0
    %1197 = vmatprep.subr.mxu0 0.0
    %1198 = vmatpush2.msra.mxu0 0.0
    %1199 = vmatprep.subr.mxu0 0.0
    %1200 = vmatpush2.msra.mxu0 0.0
    %1201 = vmatprep.subr.mxu0 0.0
    %1202 = vmatpush2.msra.mxu0 0.0
    %1203 = vmatprep.subr.mxu0 0.0
    %1204 = vmatpush2.msra.mxu0 0.0
    %1205 = vmatprep.subr.mxu0 0.0
    %1206 = vmatpush2.msra.mxu0 0.0
    %1207 = vmatprep.subr.mxu0 0.0
    %1208 = vmatpush2.msra.mxu0 0.0
    %1209 = vmatprep.subr.mxu0 0.0
    %1210 = vmatpush2.msra.mxu0 0.0
    %1211 = vmatprep.mubr.f32.mxu0 0.0
    %1212 = vmatmul.mubr.f32.gmra.mxu0 %v1145
    %v1213 = vpop.f32.mrf.mxu0
    %v1214 = vadd.f32 %v329, %v1213
    %v1215 = vpop.f32.mrf.mxu0
    %1216 = vdwg.mxu0
    %v1217 = vxor.u32 %v1214, 2147483648
    %v1218 = vmul.f32 %v1217, 1.442695
    %v1219 = vpow.pop %v1218
    %v1220 = vadd.f32 %v1219, 1.0
    %v1221 = vrcp.pop %v1220
    %v1222 = vmul.f32 1.0, %v1221
    %v1223 = vtanh.pop %v1214
    %v1224 = vmul.f32 %v1222, %v1031
    %1226 = vrot.lane.b32.xlu0 %v1223, 64
    %v1227 = vpop.permute.xlu0 %1226
    %v1229 = vmul.f32 %v1222, %v1227
    %1231 = vrot.lane.b32.xlu0 %v1229, 32
    %v1232 = vpop.permute.xlu0 %1231
    %v1234 = vadd.f32 %v1224, %v1232
    %v1235 = vtanh.pop %v1234
    %1237 = vrot.lane.b32.xlu0 %v1235, 64
    %v1238 = vpop.permute.xlu0 %1237
    %v1240 = vmul.f32 %v1222, %v1238
    %v1241 = vsel %vm221, %v1137, 0
    %1243 = vmatprep.subr.mxu0 0.0
    %1244 = vmatpush1.msra.mxu0 0.0
    %1245 = vmatprep.subr.mxu0 0.0
    %1246 = vmatpush1.msra.mxu0 0.0
    %1247 = vmatprep.subr.mxu0 0.0
    %1248 = vmatpush1.msra.mxu0 0.0
    %1249 = vmatprep.subr.mxu0 0.0
    %1250 = vmatpush1.msra.mxu0 0.0
    %1251 = vmatprep.subr.mxu0 0.0
    %1252 = vmatpush1.msra.mxu0 0.0
    %1253 = vmatprep.subr.mxu0 0.0
    %1254 = vmatpush1.msra.mxu0 0.0
    %1255 = vmatprep.subr.mxu0 0.0
    %1256 = vmatpush1.msra.mxu0 0.0
    %1257 = vmatprep.subr.mxu0 0.0
    %1258 = vmatpush1.msra.mxu0 0.0
    %1259 = vmatprep.subr.mxu0 0.0
    %1260 = vmatpush1.msra.mxu0 0.0
    %1261 = vmatprep.subr.mxu0 0.0
    %1262 = vmatpush1.msra.mxu0 0.0
    %1263 = vmatprep.subr.mxu0 0.0
    %1264 = vmatpush1.msra.mxu0 0.0
    %1265 = vmatprep.subr.mxu0 0.0
    %1266 = vmatpush1.msra.mxu0 0.0
    %1267 = vmatprep.subr.mxu0 0.0
    %1268 = vmatpush1.msra.mxu0 %v211
    %1269 = vmatprep.subr.mxu0 0.0
    %1270 = vmatpush1.msra.mxu0 %v210
    %1271 = vmatprep.subr.mxu0 0.0
    %1272 = vmatpush1.msra.mxu0 %v209
    %1273 = vmatprep.subr.mxu0 0.0
    %1274 = vmatpush1.msra.mxu0 %v208
    %1275 = vmatprep.subr.mxu0 0.0
    %1276 = vmatpush2.msra.mxu0 0.0
    %1277 = vmatprep.subr.mxu0 0.0
    %1278 = vmatpush2.msra.mxu0 0.0
    %1279 = vmatprep.subr.mxu0 0.0
    %1280 = vmatpush2.msra.mxu0 0.0
    %1281 = vmatprep.subr.mxu0 0.0
    %1282 = vmatpush2.msra.mxu0 0.0
    %1283 = vmatprep.subr.mxu0 0.0
    %1284 = vmatpush2.msra.mxu0 0.0
    %1285 = vmatprep.subr.mxu0 0.0
    %1286 = vmatpush2.msra.mxu0 0.0
    %1287 = vmatprep.subr.mxu0 0.0
    %1288 = vmatpush2.msra.mxu0 0.0
    %1289 = vmatprep.subr.mxu0 0.0
    %1290 = vmatpush2.msra.mxu0 0.0
    %1291 = vmatprep.subr.mxu0 0.0
    %1292 = vmatpush2.msra.mxu0 0.0
    %1293 = vmatprep.subr.mxu0 0.0
    %1294 = vmatpush2.msra.mxu0 0.0
    %1295 = vmatprep.subr.mxu0 0.0
    %1296 = vmatpush2.msra.mxu0 0.0
    %1297 = vmatprep.subr.mxu0 0.0
    %1298 = vmatpush2.msra.mxu0 0.0
    %1299 = vmatprep.subr.mxu0 0.0
    %1300 = vmatpush2.msra.mxu0 0.0
    %1301 = vmatprep.subr.mxu0 0.0
    %1302 = vmatpush2.msra.mxu0 0.0
    %1303 = vmatprep.subr.mxu0 0.0
    %1304 = vmatpush2.msra.mxu0 0.0
    %1305 = vmatprep.subr.mxu0 0.0
    %1306 = vmatpush2.msra.mxu0 0.0
    %1307 = vmatprep.mubr.f32.mxu0 0.0
    %1308 = vmatmul.mubr.f32.gmra.mxu0 %v1241
    %v1309 = vpop.f32.mrf.mxu0
    %v1310 = vadd.f32 0.0, %v1309
    %v1311 = vpop.f32.mrf.mxu0
    %1312 = vdwg.mxu0
    %v1313 = vadd.f32 %v195, %v1310
    %v1314 = vxor.u32 %v1313, 2147483648
    %v1315 = vmul.f32 %v1314, 1.442695
    %v1316 = vpow.pop %v1315
    %v1317 = vadd.f32 %v1316, 1.0
    %v1318 = vrcp.pop %v1317
    %v1319 = vmul.f32 1.0, %v1318
    %v1320 = vtanh.pop %v1313
    %v1321 = vmul.f32 %v1319, %v1128
    %1323 = vrot.lane.b32.xlu0 %v1320, 64
    %v1324 = vpop.permute.xlu0 %1323
    %v1326 = vmul.f32 %v1319, %v1324
    %1328 = vrot.lane.b32.xlu0 %v1326, 32
    %v1329 = vpop.permute.xlu0 %1328
    %v1331 = vadd.f32 %v1321, %v1329
    %v1332 = vtanh.pop %v1331
    %1334 = vrot.lane.b32.xlu0 %v1332, 64
    %v1335 = vpop.permute.xlu0 %1334
    %v1337 = vmul.f32 %v1319, %v1335
    %1339 = vrot.lane.b32.xlu0 %v1337, 32
    %v1340 = vpop.permute.xlu0 %1339
    %1343 = vrot.lane.b32.xlu0 %v1240, 64
    %v1344 = vpop.permute.xlu0 %1343
    %v1346 = vsel %vm221, %v1340, %v1344
    %v1348 = vsel %vm331, %v1346, 0
    %1350 = vmatprep.subr.mxu0 0.0
    %1351 = vmatpush1.msra.mxu0 0.0
    %1352 = vmatprep.subr.mxu0 0.0
    %1353 = vmatpush1.msra.mxu0 0.0
    %1354 = vmatprep.subr.mxu0 0.0
    %1355 = vmatpush1.msra.mxu0 0.0
    %1356 = vmatprep.subr.mxu0 0.0
    %1357 = vmatpush1.msra.mxu0 0.0
    %1358 = vmatprep.subr.mxu0 0.0
    %1359 = vmatpush1.msra.mxu0 0.0
    %1360 = vmatprep.subr.mxu0 0.0
    %1361 = vmatpush1.msra.mxu0 0.0
    %1362 = vmatprep.subr.mxu0 0.0
    %1363 = vmatpush1.msra.mxu0 0.0
    %1364 = vmatprep.subr.mxu0 0.0
    %1365 = vmatpush1.msra.mxu0 0.0
    %1366 = vmatprep.subr.mxu0 0.0
    %1367 = vmatpush1.msra.mxu0 %v219
    %1368 = vmatprep.subr.mxu0 0.0
    %1369 = vmatpush1.msra.mxu0 %v218
    %1370 = vmatprep.subr.mxu0 0.0
    %1371 = vmatpush1.msra.mxu0 %v217
    %1372 = vmatprep.subr.mxu0 0.0
    %1373 = vmatpush1.msra.mxu0 %v216
    %1374 = vmatprep.subr.mxu0 0.0
    %1375 = vmatpush1.msra.mxu0 %v215
    %1376 = vmatprep.subr.mxu0 0.0
    %1377 = vmatpush1.msra.mxu0 %v214
    %1378 = vmatprep.subr.mxu0 0.0
    %1379 = vmatpush1.msra.mxu0 %v213
    %1380 = vmatprep.subr.mxu0 0.0
    %1381 = vmatpush1.msra.mxu0 %v212
    %1382 = vmatprep.subr.mxu0 0.0
    %1383 = vmatpush2.msra.mxu0 0.0
    %1384 = vmatprep.subr.mxu0 0.0
    %1385 = vmatpush2.msra.mxu0 0.0
    %1386 = vmatprep.subr.mxu0 0.0
    %1387 = vmatpush2.msra.mxu0 0.0
    %1388 = vmatprep.subr.mxu0 0.0
    %1389 = vmatpush2.msra.mxu0 0.0
    %1390 = vmatprep.subr.mxu0 0.0
    %1391 = vmatpush2.msra.mxu0 0.0
    %1392 = vmatprep.subr.mxu0 0.0
    %1393 = vmatpush2.msra.mxu0 0.0
    %1394 = vmatprep.subr.mxu0 0.0
    %1395 = vmatpush2.msra.mxu0 0.0
    %1396 = vmatprep.subr.mxu0 0.0
    %1397 = vmatpush2.msra.mxu0 0.0
    %1398 = vmatprep.subr.mxu0 0.0
    %1399 = vmatpush2.msra.mxu0 0.0
    %1400 = vmatprep.subr.mxu0 0.0
    %1401 = vmatpush2.msra.mxu0 0.0
    %1402 = vmatprep.subr.mxu0 0.0
    %1403 = vmatpush2.msra.mxu0 0.0
    %1404 = vmatprep.subr.mxu0 0.0
    %1405 = vmatpush2.msra.mxu0 0.0
    %1406 = vmatprep.subr.mxu0 0.0
    %1407 = vmatpush2.msra.mxu0 0.0
    %1408 = vmatprep.subr.mxu0 0.0
    %1409 = vmatpush2.msra.mxu0 0.0
    %1410 = vmatprep.subr.mxu0 0.0
    %1411 = vmatpush2.msra.mxu0 0.0
    %1412 = vmatprep.subr.mxu0 0.0
    %1413 = vmatpush2.msra.mxu0 0.0
    %1414 = vmatprep.mubr.f32.mxu0 0.0
    %1415 = vmatmul.mubr.f32.gmra.mxu0 %v1348
    %v1416 = vpop.f32.mrf.mxu0
    %v1417 = vadd.f32 %v329, %v1416
    %v1418 = vpop.f32.mrf.mxu0
    %1419 = vdwg.mxu0
    %v1420 = vxor.u32 %v1417, 2147483648
    %v1421 = vmul.f32 %v1420, 1.442695
    %v1422 = vpow.pop %v1421
    %v1423 = vadd.f32 %v1422, 1.0
    %v1424 = vrcp.pop %v1423
    %v1425 = vmul.f32 1.0, %v1424
    %v1426 = vtanh.pop %v1417
    %v1427 = vmul.f32 %v1425, %v1234
    %1429 = vrot.lane.b32.xlu0 %v1426, 64
    %v1430 = vpop.permute.xlu0 %1429
    %v1432 = vmul.f32 %v1425, %v1430
    %1434 = vrot.lane.b32.xlu0 %v1432, 32
    %v1435 = vpop.permute.xlu0 %1434
    %v1437 = vadd.f32 %v1427, %v1435
    %v1438 = vtanh.pop %v1437
    %1440 = vrot.lane.b32.xlu0 %v1438, 64
    %v1441 = vpop.permute.xlu0 %1440
    %v1443 = vmul.f32 %v1425, %v1441
    %v1444 = vsel %vm221, %v1340, 0
    %1446 = vmatprep.subr.mxu0 0.0
    %1447 = vmatpush1.msra.mxu0 0.0
    %1448 = vmatprep.subr.mxu0 0.0
    %1449 = vmatpush1.msra.mxu0 0.0
    %1450 = vmatprep.subr.mxu0 0.0
    %1451 = vmatpush1.msra.mxu0 0.0
    %1452 = vmatprep.subr.mxu0 0.0
    %1453 = vmatpush1.msra.mxu0 0.0
    %1454 = vmatprep.subr.mxu0 0.0
    %1455 = vmatpush1.msra.mxu0 0.0
    %1456 = vmatprep.subr.mxu0 0.0
    %1457 = vmatpush1.msra.mxu0 0.0
    %1458 = vmatprep.subr.mxu0 0.0
    %1459 = vmatpush1.msra.mxu0 0.0
    %1460 = vmatprep.subr.mxu0 0.0
    %1461 = vmatpush1.msra.mxu0 0.0
    %1462 = vmatprep.subr.mxu0 0.0
    %1463 = vmatpush1.msra.mxu0 0.0
    %1464 = vmatprep.subr.mxu0 0.0
    %1465 = vmatpush1.msra.mxu0 0.0
    %1466 = vmatprep.subr.mxu0 0.0
    %1467 = vmatpush1.msra.mxu0 0.0
    %1468 = vmatprep.subr.mxu0 0.0
    %1469 = vmatpush1.msra.mxu0 0.0
    %1470 = vmatprep.subr.mxu0 0.0
    %1471 = vmatpush1.msra.mxu0 %v211
    %1472 = vmatprep.subr.mxu0 0.0
    %1473 = vmatpush1.msra.mxu0 %v210
    %1474 = vmatprep.subr.mxu0 0.0
    %1475 = vmatpush1.msra.mxu0 %v209
    %1476 = vmatprep.subr.mxu0 0.0
    %1477 = vmatpush1.msra.mxu0 %v208
    %1478 = vmatprep.subr.mxu0 0.0
    %1479 = vmatpush2.msra.mxu0 0.0
    %1480 = vmatprep.subr.mxu0 0.0
    %1481 = vmatpush2.msra.mxu0 0.0
    %1482 = vmatprep.subr.mxu0 0.0
    %1483 = vmatpush2.msra.mxu0 0.0
    %1484 = vmatprep.subr.mxu0 0.0
    %1485 = vmatpush2.msra.mxu0 0.0
    %1486 = vmatprep.subr.mxu0 0.0
    %1487 = vmatpush2.msra.mxu0 0.0
    %1488 = vmatprep.subr.mxu0 0.0
    %1489 = vmatpush2.msra.mxu0 0.0
    %1490 = vmatprep.subr.mxu0 0.0
    %1491 = vmatpush2.msra.mxu0 0.0
    %1492 = vmatprep.subr.mxu0 0.0
    %1493 = vmatpush2.msra.mxu0 0.0
    %1494 = vmatprep.subr.mxu0 0.0
    %1495 = vmatpush2.msra.mxu0 0.0
    %1496 = vmatprep.subr.mxu0 0.0
    %1497 = vmatpush2.msra.mxu0 0.0
    %1498 = vmatprep.subr.mxu0 0.0
    %1499 = vmatpush2.msra.mxu0 0.0
    %1500 = vmatprep.subr.mxu0 0.0
    %1501 = vmatpush2.msra.mxu0 0.0
    %1502 = vmatprep.subr.mxu0 0.0
    %1503 = vmatpush2.msra.mxu0 0.0
    %1504 = vmatprep.subr.mxu0 0.0
    %1505 = vmatpush2.msra.mxu0 0.0
    %1506 = vmatprep.subr.mxu0 0.0
    %1507 = vmatpush2.msra.mxu0 0.0
    %1508 = vmatprep.subr.mxu0 0.0
    %1509 = vmatpush2.msra.mxu0 0.0
    %1510 = vmatprep.mubr.f32.mxu0 0.0
    %1511 = vmatmul.mubr.f32.gmra.mxu0 %v1444
    %v1512 = vpop.f32.mrf.mxu0
    %v1513 = vadd.f32 0.0, %v1512
    %v1514 = vpop.f32.mrf.mxu0
    %1515 = vdwg.mxu0
    %v1516 = vadd.f32 %v200, %v1513
    %v1517 = vxor.u32 %v1516, 2147483648
    %v1518 = vmul.f32 %v1517, 1.442695
    %v1519 = vpow.pop %v1518
    %v1520 = vadd.f32 %v1519, 1.0
    %v1521 = vrcp.pop %v1520
    %v1522 = vmul.f32 1.0, %v1521
    %v1523 = vtanh.pop %v1516
    %v1524 = vmul.f32 %v1522, %v1331
    %1526 = vrot.lane.b32.xlu0 %v1523, 64
    %v1527 = vpop.permute.xlu0 %1526
    %v1529 = vmul.f32 %v1522, %v1527
    %1531 = vrot.lane.b32.xlu0 %v1529, 32
    %v1532 = vpop.permute.xlu0 %1531
    %v1534 = vadd.f32 %v1524, %v1532
    %v1535 = vtanh.pop %v1534
    %1537 = vrot.lane.b32.xlu0 %v1535, 64
    %v1538 = vpop.permute.xlu0 %1537
    %v1540 = vmul.f32 %v1522, %v1538
    %1542 = vrot.lane.b32.xlu0 %v1540, 32
    %v1543 = vpop.permute.xlu0 %1542
    %1546 = vrot.lane.b32.xlu0 %v1443, 64
    %v1547 = vpop.permute.xlu0 %1546
    %v1549 = vsel %vm221, %v1543, %v1547
    %v1551 = vsel %vm331, %v1549, 0
    %1553 = vmatprep.subr.mxu0 0.0
    %1554 = vmatpush1.msra.mxu0 0.0
    %1555 = vmatprep.subr.mxu0 0.0
    %1556 = vmatpush1.msra.mxu0 0.0
    %1557 = vmatprep.subr.mxu0 0.0
    %1558 = vmatpush1.msra.mxu0 0.0
    %1559 = vmatprep.subr.mxu0 0.0
    %1560 = vmatpush1.msra.mxu0 0.0
    %1561 = vmatprep.subr.mxu0 0.0
    %1562 = vmatpush1.msra.mxu0 0.0
    %1563 = vmatprep.subr.mxu0 0.0
    %1564 = vmatpush1.msra.mxu0 0.0
    %1565 = vmatprep.subr.mxu0 0.0
    %1566 = vmatpush1.msra.mxu0 0.0
    %1567 = vmatprep.subr.mxu0 0.0
    %1568 = vmatpush1.msra.mxu0 0.0
    %1569 = vmatprep.subr.mxu0 0.0
    %1570 = vmatpush1.msra.mxu0 %v219
    %1571 = vmatprep.subr.mxu0 0.0
    %1572 = vmatpush1.msra.mxu0 %v218
    %1573 = vmatprep.subr.mxu0 0.0
    %1574 = vmatpush1.msra.mxu0 %v217
    %1575 = vmatprep.subr.mxu0 0.0
    %1576 = vmatpush1.msra.mxu0 %v216
    %1577 = vmatprep.subr.mxu0 0.0
    %1578 = vmatpush1.msra.mxu0 %v215
    %1579 = vmatprep.subr.mxu0 0.0
    %1580 = vmatpush1.msra.mxu0 %v214
    %1581 = vmatprep.subr.mxu0 0.0
    %1582 = vmatpush1.msra.mxu0 %v213
    %1583 = vmatprep.subr.mxu0 0.0
    %1584 = vmatpush1.msra.mxu0 %v212
    %1585 = vmatprep.subr.mxu0 0.0
    %1586 = vmatpush2.msra.mxu0 0.0
    %1587 = vmatprep.subr.mxu0 0.0
    %1588 = vmatpush2.msra.mxu0 0.0
    %1589 = vmatprep.subr.mxu0 0.0
    %1590 = vmatpush2.msra.mxu0 0.0
    %1591 = vmatprep.subr.mxu0 0.0
    %1592 = vmatpush2.msra.mxu0 0.0
    %1593 = vmatprep.subr.mxu0 0.0
    %1594 = vmatpush2.msra.mxu0 0.0
    %1595 = vmatprep.subr.mxu0 0.0
    %1596 = vmatpush2.msra.mxu0 0.0
    %1597 = vmatprep.subr.mxu0 0.0
    %1598 = vmatpush2.msra.mxu0 0.0
    %1599 = vmatprep.subr.mxu0 0.0
    %1600 = vmatpush2.msra.mxu0 0.0
    %1601 = vmatprep.subr.mxu0 0.0
    %1602 = vmatpush2.msra.mxu0 0.0
    %1603 = vmatprep.subr.mxu0 0.0
    %1604 = vmatpush2.msra.mxu0 0.0
    %1605 = vmatprep.subr.mxu0 0.0
    %1606 = vmatpush2.msra.mxu0 0.0
    %1607 = vmatprep.subr.mxu0 0.0
    %1608 = vmatpush2.msra.mxu0 0.0
    %1609 = vmatprep.subr.mxu0 0.0
    %1610 = vmatpush2.msra.mxu0 0.0
    %1611 = vmatprep.subr.mxu0 0.0
    %1612 = vmatpush2.msra.mxu0 0.0
    %1613 = vmatprep.subr.mxu0 0.0
    %1614 = vmatpush2.msra.mxu0 0.0
    %1615 = vmatprep.subr.mxu0 0.0
    %1616 = vmatpush2.msra.mxu0 0.0
    %1617 = vmatprep.mubr.f32.mxu0 0.0
    %1618 = vmatmul.mubr.f32.gmra.mxu0 %v1551
    %v1619 = vpop.f32.mrf.mxu0
    %v1620 = vadd.f32 %v329, %v1619
    %v1621 = vpop.f32.mrf.mxu0
    %1622 = vdwg.mxu0
    %v1623 = vxor.u32 %v1620, 2147483648
    %v1624 = vmul.f32 %v1623, 1.442695
    %v1625 = vpow.pop %v1624
    %v1626 = vadd.f32 %v1625, 1.0
    %v1627 = vrcp.pop %v1626
    %v1628 = vmul.f32 1.0, %v1627
    %v1629 = vtanh.pop %v1620
    %v1630 = vmul.f32 %v1628, %v1437
    %1632 = vrot.lane.b32.xlu0 %v1629, 64
    %v1633 = vpop.permute.xlu0 %1632
    %v1635 = vmul.f32 %v1628, %v1633
    %1637 = vrot.lane.b32.xlu0 %v1635, 32
    %v1638 = vpop.permute.xlu0 %1637
    %v1640 = vadd.f32 %v1630, %v1638
    %v1641 = vtanh.pop %v1640
    %1643 = vrot.lane.b32.xlu0 %v1641, 64
    %v1644 = vpop.permute.xlu0 %1643
    %v1646 = vmul.f32 %v1628, %v1644
    %v1647 = vsel %vm221, %v1543, 0
    %1649 = vmatprep.subr.mxu0 0.0
    %1650 = vmatpush1.msra.mxu0 0.0
    %1651 = vmatprep.subr.mxu0 0.0
    %1652 = vmatpush1.msra.mxu0 0.0
    %1653 = vmatprep.subr.mxu0 0.0
    %1654 = vmatpush1.msra.mxu0 0.0
    %1655 = vmatprep.subr.mxu0 0.0
    %1656 = vmatpush1.msra.mxu0 0.0
    %1657 = vmatprep.subr.mxu0 0.0
    %1658 = vmatpush1.msra.mxu0 0.0
    %1659 = vmatprep.subr.mxu0 0.0
    %1660 = vmatpush1.msra.mxu0 0.0
    %1661 = vmatprep.subr.mxu0 0.0
    %1662 = vmatpush1.msra.mxu0 0.0
    %1663 = vmatprep.subr.mxu0 0.0
    %1664 = vmatpush1.msra.mxu0 0.0
    %1665 = vmatprep.subr.mxu0 0.0
    %1666 = vmatpush1.msra.mxu0 0.0
    %1667 = vmatprep.subr.mxu0 0.0
    %1668 = vmatpush1.msra.mxu0 0.0
    %1669 = vmatprep.subr.mxu0 0.0
    %1670 = vmatpush1.msra.mxu0 0.0
    %1671 = vmatprep.subr.mxu0 0.0
    %1672 = vmatpush1.msra.mxu0 0.0
    %1673 = vmatprep.subr.mxu0 0.0
    %1674 = vmatpush1.msra.mxu0 %v211
    %1675 = vmatprep.subr.mxu0 0.0
    %1676 = vmatpush1.msra.mxu0 %v210
    %1677 = vmatprep.subr.mxu0 0.0
    %1678 = vmatpush1.msra.mxu0 %v209
    %1679 = vmatprep.subr.mxu0 0.0
    %1680 = vmatpush1.msra.mxu0 %v208
    %1681 = vmatprep.subr.mxu0 0.0
    %1682 = vmatpush2.msra.mxu0 0.0
    %1683 = vmatprep.subr.mxu0 0.0
    %1684 = vmatpush2.msra.mxu0 0.0
    %1685 = vmatprep.subr.mxu0 0.0
    %1686 = vmatpush2.msra.mxu0 0.0
    %1687 = vmatprep.subr.mxu0 0.0
    %1688 = vmatpush2.msra.mxu0 0.0
    %1689 = vmatprep.subr.mxu0 0.0
    %1690 = vmatpush2.msra.mxu0 0.0
    %1691 = vmatprep.subr.mxu0 0.0
    %1692 = vmatpush2.msra.mxu0 0.0
    %1693 = vmatprep.subr.mxu0 0.0
    %1694 = vmatpush2.msra.mxu0 0.0
    %1695 = vmatprep.subr.mxu0 0.0
    %1696 = vmatpush2.msra.mxu0 0.0
    %1697 = vmatprep.subr.mxu0 0.0
    %1698 = vmatpush2.msra.mxu0 0.0
    %1699 = vmatprep.subr.mxu0 0.0
    %1700 = vmatpush2.msra.mxu0 0.0
    %1701 = vmatprep.subr.mxu0 0.0
    %1702 = vmatpush2.msra.mxu0 0.0
    %1703 = vmatprep.subr.mxu0 0.0
    %1704 = vmatpush2.msra.mxu0 0.0
    %1705 = vmatprep.subr.mxu0 0.0
    %1706 = vmatpush2.msra.mxu0 0.0
    %1707 = vmatprep.subr.mxu0 0.0
    %1708 = vmatpush2.msra.mxu0 0.0
    %1709 = vmatprep.subr.mxu0 0.0
    %1710 = vmatpush2.msra.mxu0 0.0
    %1711 = vmatprep.subr.mxu0 0.0
    %1712 = vmatpush2.msra.mxu0 0.0
    %1713 = vmatprep.mubr.f32.mxu0 0.0
    %1714 = vmatmul.mubr.f32.gmra.mxu0 %v1647
    %v1715 = vpop.f32.mrf.mxu0
    %v1716 = vadd.f32 0.0, %v1715
    %v1717 = vpop.f32.mrf.mxu0
    %1718 = vdwg.mxu0
    %v1719 = vadd.f32 %v205, %v1716
    %v1720 = vxor.u32 %v1719, 2147483648
    %v1721 = vmul.f32 %v1720, 1.442695
    %v1722 = vpow.pop %v1721
    %v1723 = vadd.f32 %v1722, 1.0
    %v1724 = vrcp.pop %v1723
    %v1725 = vmul.f32 1.0, %v1724
    %v1726 = vtanh.pop %v1719
    %v1727 = vmul.f32 %v1725, %v1534
    %1729 = vrot.lane.b32.xlu0 %v1726, 64
    %v1730 = vpop.permute.xlu0 %1729
    %v1732 = vmul.f32 %v1725, %v1730
    %1734 = vrot.lane.b32.xlu0 %v1732, 32
    %v1735 = vpop.permute.xlu0 %1734
    %v1737 = vadd.f32 %v1727, %v1735
    %v1738 = vtanh.pop %v1737
    %1740 = vrot.lane.b32.xlu0 %v1738, 64
    %v1741 = vpop.permute.xlu0 %1740
    %v1743 = vmul.f32 %v1725, %v1741
    %1745 = vrot.lane.b32.xlu0 %v1743, 32
    %v1746 = vpop.permute.xlu0 %1745
    %1749 = vrot.lane.b32.xlu0 %v1646, 64
    %v1750 = vpop.permute.xlu0 %1749
    %v1752 = vsel %vm221, %v1746, %v1750
    %v1754 = vsel %vm331, %v1752, 0
    %1756 = vmatprep.subr.mxu0 0.0
    %1757 = vmatpush1.msra.mxu0 0.0
    %1758 = vmatprep.subr.mxu0 0.0
    %1759 = vmatpush1.msra.mxu0 0.0
    %1760 = vmatprep.subr.mxu0 0.0
    %1761 = vmatpush1.msra.mxu0 0.0
    %1762 = vmatprep.subr.mxu0 0.0
    %1763 = vmatpush1.msra.mxu0 0.0
    %1764 = vmatprep.subr.mxu0 0.0
    %1765 = vmatpush1.msra.mxu0 0.0
    %1766 = vmatprep.subr.mxu0 0.0
    %1767 = vmatpush1.msra.mxu0 0.0
    %1768 = vmatprep.subr.mxu0 0.0
    %1769 = vmatpush1.msra.mxu0 0.0
    %1770 = vmatprep.subr.mxu0 0.0
    %1771 = vmatpush1.msra.mxu0 0.0
    %1772 = vmatprep.subr.mxu0 0.0
    %1773 = vmatpush1.msra.mxu0 %v219
    %1774 = vmatprep.subr.mxu0 0.0
    %1775 = vmatpush1.msra.mxu0 %v218
    %1776 = vmatprep.subr.mxu0 0.0
    %1777 = vmatpush1.msra.mxu0 %v217
    %1778 = vmatprep.subr.mxu0 0.0
    %1779 = vmatpush1.msra.mxu0 %v216
    %1780 = vmatprep.subr.mxu0 0.0
    %1781 = vmatpush1.msra.mxu0 %v215
    %1782 = vmatprep.subr.mxu0 0.0
    %1783 = vmatpush1.msra.mxu0 %v214
    %1784 = vmatprep.subr.mxu0 0.0
    %1785 = vmatpush1.msra.mxu0 %v213
    %1786 = vmatprep.subr.mxu0 0.0
    %1787 = vmatpush1.msra.mxu0 %v212
    %1788 = vmatprep.subr.mxu0 0.0
    %1789 = vmatpush2.msra.mxu0 0.0
    %1790 = vmatprep.subr.mxu0 0.0
    %1791 = vmatpush2.msra.mxu0 0.0
    %1792 = vmatprep.subr.mxu0 0.0
    %1793 = vmatpush2.msra.mxu0 0.0
    %1794 = vmatprep.subr.mxu0 0.0
    %1795 = vmatpush2.msra.mxu0 0.0
    %1796 = vmatprep.subr.mxu0 0.0
    %1797 = vmatpush2.msra.mxu0 0.0
    %1798 = vmatprep.subr.mxu0 0.0
    %1799 = vmatpush2.msra.mxu0 0.0
    %1800 = vmatprep.subr.mxu0 0.0
    %1801 = vmatpush2.msra.mxu0 0.0
    %1802 = vmatprep.subr.mxu0 0.0
    %1803 = vmatpush2.msra.mxu0 0.0
    %1804 = vmatprep.subr.mxu0 0.0
    %1805 = vmatpush2.msra.mxu0 0.0
    %1806 = vmatprep.subr.mxu0 0.0
    %1807 = vmatpush2.msra.mxu0 0.0
    %1808 = vmatprep.subr.mxu0 0.0
    %1809 = vmatpush2.msra.mxu0 0.0
    %1810 = vmatprep.subr.mxu0 0.0
    %1811 = vmatpush2.msra.mxu0 0.0
    %1812 = vmatprep.subr.mxu0 0.0
    %1813 = vmatpush2.msra.mxu0 0.0
    %1814 = vmatprep.subr.mxu0 0.0
    %1815 = vmatpush2.msra.mxu0 0.0
    %1816 = vmatprep.subr.mxu0 0.0
    %1817 = vmatpush2.msra.mxu0 0.0
    %1818 = vmatprep.subr.mxu0 0.0
    %1819 = vmatpush2.msra.mxu0 0.0
    %1820 = vmatprep.mubr.f32.mxu0 0.0
    %1821 = vmatmul.mubr.f32.gmra.mxu0 %v1754
    %v1822 = vpop.f32.mrf.mxu0
    %v1823 = vadd.f32 %v329, %v1822
    %v1824 = vpop.f32.mrf.mxu0
    %1825 = vdwg.mxu0
    %v1826 = vxor.u32 %v1823, 2147483648
    %v1827 = vmul.f32 %v1826, 1.442695
    %v1828 = vpow.pop %v1827
    %v1829 = vadd.f32 %v1828, 1.0
    %v1830 = vrcp.pop %v1829
    %v1831 = vmul.f32 1.0, %v1830
    %v1832 = vtanh.pop %v1823
    %v1833 = vmul.f32 %v1831, %v1640
    %1835 = vrot.lane.b32.xlu0 %v1832, 64
    %v1836 = vpop.permute.xlu0 %1835
    %v1838 = vmul.f32 %v1831, %v1836
    %1840 = vrot.lane.b32.xlu0 %v1838, 32
    %v1841 = vpop.permute.xlu0 %1840
    %v1843 = vadd.f32 %v1833, %v1841
    %v1844 = vtanh.pop %v1843
    %1846 = vrot.lane.b32.xlu0 %v1844, 64
    %v1847 = vpop.permute.xlu0 %1846
    %v1849 = vmul.f32 %v1831, %v1847
    %v1850 = vld [vmem:[#allocation5] sm:$0xff]
    %v1851 = vld [vmem:[#allocation5 + $0x8] sm:$0xff]
    %v1852 = vld [vmem:[#allocation5 + $0x10] sm:$0xff]
    %v1853 = vld [vmem:[#allocation5 + $0x18] sm:$0xff]
    %v1854 = vld [vmem:[%s7] sm:$0x1]
    %v1856 = vlaneseq
    %v1857 = vshrl.u32 %v1856, 7
    %v1858 = vsub.s32 0, %v1857
    %v1859 = vrot.slane %v1854, %v1858
    %1862 = vrot.lane.b32.xlu0 %v1849, 32
    %v1863 = vpop.permute.xlu0 %1862
    %v1864 = vsel %vm221, %v1863, 0
    %1866 = vmatprep.subr.mxu0 0.0
    %1867 = vmatpush1.msra.mxu0 0.0
    %1868 = vmatprep.subr.mxu0 0.0
    %1869 = vmatpush1.msra.mxu0 0.0
    %1870 = vmatprep.subr.mxu0 0.0
    %1871 = vmatpush1.msra.mxu0 0.0
    %1872 = vmatprep.subr.mxu0 0.0
    %1873 = vmatpush1.msra.mxu0 0.0
    %1874 = vmatprep.subr.mxu0 0.0
    %1875 = vmatpush1.msra.mxu0 0.0
    %1876 = vmatprep.subr.mxu0 0.0
    %1877 = vmatpush1.msra.mxu0 0.0
    %1878 = vmatprep.subr.mxu0 0.0
    %1879 = vmatpush1.msra.mxu0 0.0
    %1880 = vmatprep.subr.mxu0 0.0
    %1881 = vmatpush1.msra.mxu0 0.0
    %1882 = vmatprep.subr.mxu0 0.0
    %1883 = vmatpush1.msra.mxu0 0.0
    %1884 = vmatprep.subr.mxu0 0.0
    %1885 = vmatpush1.msra.mxu0 0.0
    %1886 = vmatprep.subr.mxu0 0.0
    %1887 = vmatpush1.msra.mxu0 0.0
    %1888 = vmatprep.subr.mxu0 0.0
    %1889 = vmatpush1.msra.mxu0 0.0
    %1890 = vmatprep.subr.mxu0 0.0
    %1891 = vmatpush1.msra.mxu0 %v1853
    %1892 = vmatprep.subr.mxu0 0.0
    %1893 = vmatpush1.msra.mxu0 %v1852
    %1894 = vmatprep.subr.mxu0 0.0
    %1895 = vmatpush1.msra.mxu0 %v1851
    %1896 = vmatprep.subr.mxu0 0.0
    %1897 = vmatpush1.msra.mxu0 %v1850
    %1898 = vmatprep.subr.mxu0 0.0
    %1899 = vmatpush2.msra.mxu0 0.0
    %1900 = vmatprep.subr.mxu0 0.0
    %1901 = vmatpush2.msra.mxu0 0.0
    %1902 = vmatprep.subr.mxu0 0.0
    %1903 = vmatpush2.msra.mxu0 0.0
    %1904 = vmatprep.subr.mxu0 0.0
    %1905 = vmatpush2.msra.mxu0 0.0
    %1906 = vmatprep.subr.mxu0 0.0
    %1907 = vmatpush2.msra.mxu0 0.0
    %1908 = vmatprep.subr.mxu0 0.0
    %1909 = vmatpush2.msra.mxu0 0.0
    %1910 = vmatprep.subr.mxu0 0.0
    %1911 = vmatpush2.msra.mxu0 0.0
    %1912 = vmatprep.subr.mxu0 0.0
    %1913 = vmatpush2.msra.mxu0 0.0
    %1914 = vmatprep.subr.mxu0 0.0
    %1915 = vmatpush2.msra.mxu0 0.0
    %1916 = vmatprep.subr.mxu0 0.0
    %1917 = vmatpush2.msra.mxu0 0.0
    %1918 = vmatprep.subr.mxu0 0.0
    %1919 = vmatpush2.msra.mxu0 0.0
    %1920 = vmatprep.subr.mxu0 0.0
    %1921 = vmatpush2.msra.mxu0 0.0
    %1922 = vmatprep.subr.mxu0 0.0
    %1923 = vmatpush2.msra.mxu0 0.0
    %1924 = vmatprep.subr.mxu0 0.0
    %1925 = vmatpush2.msra.mxu0 0.0
    %1926 = vmatprep.subr.mxu0 0.0
    %1927 = vmatpush2.msra.mxu0 0.0
    %1928 = vmatprep.subr.mxu0 0.0
    %1929 = vmatpush2.msra.mxu0 0.0
    %1930 = vmatprep.mubr.f32.mxu0 0.0
    %1931 = vmatmul.mubr.f32.gmra.mxu0 %v1864
    %v1932 = vpop.f32.mrf.mxu0
    %v1933 = vadd.f32 %v1859, %v1932
    %v1934 = vpop.f32.mrf.mxu0
    %1935 = vdwg.mxu0
    %1936 = vst [vmem:[#allocation7] sm:$0xff] %v1933
    // Predicated region
    $region42: #{tpu_custom_call.1} parent=1 // pred_check
      _
    $region43: #{tpu_custom_call.1} parent=1 // pred_check_branch
      %1938 = sbr.rel (0) target = $region45
    $region44: #{tpu_custom_call.1} parent=1 // pred_region
      %s1940 = ssub.s32 128, 128
      %1941 = vsyncadd [#allocation4], %s1940
      %s1943 = sshll.u32 [#allocation7], 4
      %s1944 = int_to_ptr.vmem [resolvable:$true] %s1943
      %1946 = dma.vmem_to_hbm [thread:$0]  %s1944, 128, %s8, [#allocation4]
    $region45: #{tpu_custom_call.1} parent=1 // pred_fallthru
      _
    // Predicated region
    $region46: #{tpu_custom_call.1} parent=1 // pred_check
      _
    $region47: #{tpu_custom_call.1} parent=1 // pred_check_branch
      %1948 = sbr.rel (0) target = $region49
    $region48: #{tpu_custom_call.1} parent=1 // pred_region
      %1949 = dma.done [#allocation4], 128
    $region49: #{tpu_custom_call.1} parent=1 // pred_fallthru
      _
    %1950 = vsyncpa [#allocation3], 1
    %1951 = vsyncpa [#allocation6], 1
    %1952 = vsyncpa [#allocation4], 1

</llo_original>
